<compile_context>
chip_gen: v7x
topology: tpu7x:2x2x1
jax: 0.10.0
libtpu: 0.0.40
codegen_flags: <defaults>
</compile_context>

<pallas_src>
import functools
import math

import jax
import jax.numpy as jnp
from jax import lax
from jax.experimental import pallas as pl
from jax.experimental.pallas import tpu as pltpu


def _round_up(x, m):
    return ((x + m - 1) // m) * m


def _vmem_capacity_bytes():
    try:
        return int(pltpu.get_tpu_info().vmem_capacity_bytes)
    except Exception:
        return 64 * 1024 * 1024      # conservative (v7x per-TC VMEM)


# ---------------------------------------------------------------------------
# Pallas kernel 1 (runs ONCE): L2-normalise tri_rel and compute the attention
# logits of every layer of both encoders in a single pass (they only depend on
# the normalised tri_rel and the per-layer attention kernels).
# ---------------------------------------------------------------------------
def _norm_att_kernel(tri_ref, w_ref, tr_ref, att_ref):
    tri = tri_ref[...]                                           # (TT, D)
    # F.normalize(p=2): x / max(||x||, 1e-12)
    inv = lax.rsqrt(jnp.maximum(jnp.sum(tri * tri, axis=-1, keepdims=True), 1e-24))
    tr = tri * inv
    tr_ref[...] = tr
    att_ref[...] = jnp.dot(tr, w_ref[...], preferred_element_type=jnp.float32)


def pallas_normalize_and_attention(tri_rel_raw, attn_mat, *, block_t=2048):
    """Returns (tr (T,D) normalised, att (T,L) logits for all layers/encoders)."""
    tri = tri_rel_raw.astype(jnp.float32)
    T, D = tri.shape
    L = attn_mat.shape[1]
    TT = min(block_t, _round_up(T, 8))
    T_pad = _round_up(T, TT)
    if T_pad != T:
        tri = jnp.pad(tri, ((0, T_pad - T), (0, 0)))

    tr, att = pl.pallas_call(
        _norm_att_kernel,
        out_shape=(jax.ShapeDtypeStruct((T_pad, D), jnp.float32),
                   jax.ShapeDtypeStruct((T_pad, L), jnp.float32)),
        grid=(T_pad // TT,),
        in_specs=[pl.BlockSpec((TT, D), lambda t: (t, 0)),
                  pl.BlockSpec((D, L), lambda t: (0, 0))],
        out_specs=(pl.BlockSpec((TT, D), lambda t: (t, 0)),
                   pl.BlockSpec((TT, L), lambda t: (t, 0))),
        compiler_params=pltpu.CompilerParams(dimension_semantics=("parallel",)),
    )(tri, attn_mat.astype(jnp.float32))
    return tr[:T], att[:T]


# ---------------------------------------------------------------------------
# Pallas kernel 2 (per layer, ent+rel FUSED): Householder reflection of both
# encoders' neighbour features by the shared, pre-normalised tri_rel.
# ---------------------------------------------------------------------------
def _reflect_kernel(tr_ref, ne_ref, nr_ref, oe_ref, or_ref):
    tr = tr_ref[...]                                             # (TT, D)
    ne = ne_ref[...]
    nr = nr_ref[...]
    oe_ref[...] = ne - 2.0 * jnp.sum(ne * tr, axis=-1, keepdims=True) * tr
    or_ref[...] = nr - 2.0 * jnp.sum(nr * tr, axis=-1, keepdims=True) * tr


def pallas_dual_reflection(tr, nei_e, nei_r, *, block_t=2048):
    tr = tr.astype(jnp.float32)
    nei_e = nei_e.astype(jnp.float32)
    nei_r = nei_r.astype(jnp.float32)
    T, D = tr.shape
    TT = min(block_t, _round_up(T, 8))
    T_pad = _round_up(T, TT)
    if T_pad != T:
        pad = ((0, T_pad - T), (0, 0))
        tr = jnp.pad(tr, pad)
        nei_e = jnp.pad(nei_e, pad)
        nei_r = jnp.pad(nei_r, pad)

    refl_e, refl_r = pl.pallas_call(
        _reflect_kernel,
        out_shape=(jax.ShapeDtypeStruct((T_pad, D), jnp.float32),
                   jax.ShapeDtypeStruct((T_pad, D), jnp.float32)),
        grid=(T_pad // TT,),
        in_specs=[pl.BlockSpec((TT, D), lambda t: (t, 0))] * 3,
        out_specs=(pl.BlockSpec((TT, D), lambda t: (t, 0)),
                   pl.BlockSpec((TT, D), lambda t: (t, 0))),
        compiler_params=pltpu.CompilerParams(dimension_semantics=("parallel",)),
    )(tr, nei_e, nei_r)
    return refl_e[:T], refl_r[:T]


# ---------------------------------------------------------------------------
# Pallas kernel 3: align_loss, tiled over (pair tile, phase, N tile).
#   phase 0: per-row sum / sumsq / max of the masked margin loss.
#   phase 1: per-row sum(exp(z - z_max)) and final logsumexp.
# The (TP, TN) mask is built in-kernel from index columns + broadcasted_iota.
# The distance matmul runs in bf16 on the MXU; norms stay in f32.
# ---------------------------------------------------------------------------
def _align_kernel(lr_ref, lrsq_ref, pos_ref, emb_ref, esq_ref, l_ref, r_ref,
                  o_ref, sum_s, sq_s, max_s, es_s,
                  *, node_size, block_n, gamma, lamb, tau):
    ph = pl.program_id(1)
    n = pl.program_id(2)
    n_last = pl.num_programs(2) - 1
    TP = lr_ref.shape[0]

    # squared distance tile: ||x||^2 + ||e||^2 - 2 x.e  (bf16 MXU, f32 acc)
    xe = lax.dot_general(lr_ref[...], emb_ref[...], (((1,), (1,)), ((), ())),
                         preferred_element_type=jnp.float32)      # (TP, TN)
    neg_dis = lrsq_ref[...] + esq_ref[...] - 2.0 * xe

    # mask = 1 - onehot(l) - onehot(r), built from iota + index columns
    cols = n * block_n + lax.broadcasted_iota(jnp.int32, (TP, block_n), 1)
    mask = (1.0
            - (cols == l_ref[...]).astype(jnp.float32)
            - (cols == r_ref[...]).astype(jnp.float32))
    valid = cols < node_size                                      # exclude N-padding

    loss = (pos_ref[...] - neg_dis + gamma) * mask
    loss = jnp.where(valid, loss, 0.0)

    @pl.when((ph == 0) & (n == 0))
    def _():
        sum_s[...] = jnp.zeros_like(sum_s)
        sq_s[...] = jnp.zeros_like(sq_s)
        max_s[...] = jnp.full_like(max_s, -jnp.inf)

    @pl.when(ph == 0)
    def _():
        sum_s[...] += jnp.sum(loss, axis=-1, keepdims=True)
        sq_s[...] += jnp.sum(loss * loss, axis=-1, keepdims=True)
        tile_max = jnp.max(jnp.where(valid, loss, -jnp.inf), axis=-1, keepdims=True)
        max_s[...] = jnp.maximum(max_s[...], tile_max)

    @pl.when(ph == 1)
    def _():
        @pl.when(n == 0)
        def _():
            es_s[...] = jnp.zeros_like(es_s)

        inv_n = 1.0 / float(node_size)
        mu = sum_s[...] * inv_n
        # TODO(synk): E[x^2]-mu^2 in f32 can cancel for very large means; a
        # centred third pass would be needed to match torch.std bit-exactly.
        var = jnp.maximum(sq_s[...] * inv_n - mu * mu, 1e-12)     # unbiased=False
        inv_std = lax.rsqrt(var)
        z_max = lamb * (max_s[...] - mu) * inv_std + tau          # z at argmax loss
        z = lamb * (loss - mu) * inv_std + tau
        es_s[...] += jnp.sum(jnp.where(valid, jnp.exp(z - z_max), 0.0),
                             axis=-1, keepdims=True)

        @pl.when(n == n_last)
        def _():
            o_ref[...] = z_max + jnp.log(es_s[...])               # per-row logsumexp


def pallas_align_loss(lr_emb, pos2, emb, l_idx, r_idx, node_size,
                      gamma=3.0, lamb=20.0, tau=8.0,
                      block_p=512, block_n=None):
    lr_emb = lr_emb.astype(jnp.float32)
    emb = emb.astype(jnp.float32)
    P2, D = lr_emb.shape
    n_pairs = P2 // 2
    N = emb.shape[0]

    # N-tile sized for the smallest-VMEM target (v7x: 64 MiB); larger on v5e/v6e.
    if block_n is None:
        block_n = 1024 if _vmem_capacity_bytes() >= 100 * 1024 * 1024 else 512

    Dp = _round_up(D, 128)                       # full 128-lane vregs for the MXU K dim
    TN = min(block_n, _round_up(N, 128))
    N_pad = _round_up(N, TN)
    TP = min(block_p, _round_up(P2, 8))
    P2_pad = _round_up(P2, TP)

    # f32 norms (precision), bf16 operands for the MXU matmul.
    emb_sq = jnp.sum(emb * emb, axis=-1)[None, :]                 # (1, N)
    lr_sq = jnp.sum(lr_emb * lr_emb, axis=-1, keepdims=True)      # (P2, 1)

    emb_bf = jnp.pad(emb, ((0, N_pad - N), (0, Dp - D))).astype(jnp.bfloat16)
    lr_bf = jnp.pad(lr_emb, ((0, P2_pad - P2), (0, Dp - D))).astype(jnp.bfloat16)
    emb_sq = jnp.pad(emb_sq, ((0, 0), (0, N_pad - N)))
    lr_sq = jnp.pad(lr_sq, ((0, P2_pad - P2), (0, 0)))
    pos2 = jnp.pad(pos2.astype(jnp.float32), ((0, P2_pad - P2), (0, 0)))

    lcol = jnp.pad(jnp.concatenate([l_idx, l_idx]).astype(jnp.int32),
                   (0, P2_pad - P2), constant_values=-1).reshape(P2_pad, 1)
    rcol = jnp.pad(jnp.concatenate([r_idx, r_idx]).astype(jnp.int32),
                   (0, P2_pad - P2), constant_values=-1).reshape(P2_pad, 1)

    n_p = P2_pad // TP
    n_n = N_pad // TN

    kernel = functools.partial(
        _align_kernel, node_size=int(node_size), block_n=TN,
        gamma=float(gamma), lamb=float(lamb), tau=float(tau))

    # Explicit scoped-VMEM budget: double-buffered inputs + loss-tile temporaries
    # + lane-padded accumulators (headroom x2, clamped to a safe range).
    est = (2 * (TP * Dp * 2 + TN * Dp * 2 + TN * 4 + 3 * TP * 4 + 2 * TP * 4)
           + 8 * TP * TN * 4 + 5 * TP * 128 * 4)
    vmem_limit = int(min(100 * 1024 * 1024, max(2 * est, 32 * 1024 * 1024)))

    lse = pl.pallas_call(
        kernel,
        out_shape=jax.ShapeDtypeStruct((P2_pad, 1), jnp.float32),
        grid=(n_p, 2, n_n),                           # (pair tile, phase, N tile)
        in_specs=[pl.BlockSpec((TP, Dp), lambda p, ph, n: (p, 0)),   # lr tile (bf16)
                  pl.BlockSpec((TP, 1), lambda p, ph, n: (p, 0)),    # ||lr||^2 (f32)
                  pl.BlockSpec((TP, 1), lambda p, ph, n: (p, 0)),    # pos_dis
                  pl.BlockSpec((TN, Dp), lambda p, ph, n: (n, 0)),   # emb tile (bf16)
                  pl.BlockSpec((1, TN), lambda p, ph, n: (0, n)),    # ||emb||^2 (f32)
                  pl.BlockSpec((TP, 1), lambda p, ph, n: (p, 0)),    # l indices
                  pl.BlockSpec((TP, 1), lambda p, ph, n: (p, 0))],   # r indices
        out_specs=pl.BlockSpec((TP, 1), lambda p, ph, n: (p, 0)),
        scratch_shapes=[pltpu.VMEM((TP, 1), jnp.float32),            # sum
                        pltpu.VMEM((TP, 1), jnp.float32),            # sumsq
                        pltpu.VMEM((TP, 1), jnp.float32),            # max
                        pltpu.VMEM((TP, 1), jnp.float32)],           # exp-sum
        compiler_params=pltpu.CompilerParams(
            dimension_semantics=("parallel", "arbitrary", "arbitrary"),
            vmem_limit_bytes=vmem_limit),
    )(lr_bf, lr_sq, pos2, emb_bf, emb_sq, lcol, rcol)

    # mean(l_loss + r_loss) over pairs == sum over all 2P rows / P
    return jnp.sum(lse[:P2, 0]) / float(n_pairs)


# ------------------------------ model (glue) --------------------------------
def sparse_row_mean(idx, emb, n_rows):
    """torch.sparse.softmax(all-ones COO, dim=1) @ emb  ==  per-row mean of gathered emb."""
    # TODO(synk): duplicate COO entries counted as separate stored elements
    # (matches uncoalesced all-ones softmax).
    rows, cols = idx[0], idx[1]
    gathered = jnp.take(emb.astype(jnp.float32), cols, axis=0)
    sums = jax.ops.segment_sum(gathered, rows, num_segments=n_rows)
    cnts = jax.ops.segment_sum(jnp.ones_like(rows, jnp.float32), rows, num_segments=n_rows)
    return sums / jnp.maximum(cnts, 1.0)[:, None]


def _segment_softmax_agg(att, refl, head, node_size):
    # TODO(synk): per-head-node sparse softmax + aggregation stays as XLA segment
    # ops; a sorted-CSR PrefetchScalarGridSpec Pallas kernel is the next
    # structural win at production graph sizes.
    row_max = jax.ops.segment_max(att, head, num_segments=node_size)
    e = jnp.exp(att - row_max[head])
    row_sum = jax.ops.segment_sum(e, head, num_segments=node_size)
    w = e / row_sum[head]
    return jax.ops.segment_sum(w[:, None] * refl, head, num_segments=node_size)


def dual_graph_attention(feat_e, feat_r, tr, att_e, att_r, adj, node_size, depth):
    # TODO(synk): NR_GraphAttention source was not shipped with the module; this
    # follows the standard RREA NR_GraphAttention (tanh activation, relational
    # Householder reflection, per-head-node sparse softmax, depth-wise concat).
    head, tail = adj[0], adj[1]
    fe = jnp.tanh(feat_e)
    fr = jnp.tanh(feat_r)
    outs_e = [fe]
    outs_r = [fr]
    for layer in range(depth):
        nei_e = jnp.take(fe, tail, axis=0)
        nei_r = jnp.take(fr, tail, axis=0)
        refl_e, refl_r = pallas_dual_reflection(tr, nei_e, nei_r)
        fe = jnp.tanh(_segment_softmax_agg(att_e[:, layer], refl_e, head, node_size))
        fr = jnp.tanh(_segment_softmax_agg(att_r[:, layer], refl_r, head, node_size))
        outs_e.append(fe)
        outs_r.append(fr)
    return jnp.concatenate(outs_e, axis=-1), jnp.concatenate(outs_r, axis=-1)


def encoder_forward(params, graph, train_pairs, *, node_size, rel_size,
                    triple_size, depth, gamma):
    # ---------------- gcn_forward (sparse, no densification) ----------------
    ent_feature = sparse_row_mean(graph["ent_adj"], params["ent_emb"], node_size)
    rel_feature = sparse_row_mean(graph["rel_adj"], params["rel_emb"], node_size)
    # NOTE: the reference also computes img_feature @ img_emb but never consumes
    # it in forward(); removed as dead code.

    # tri_rel = sparse (T,R) @ rel_emb  ->  weighted gather + segment-sum, O(nnz*D)
    r_rows, r_cols = graph["r_index"][0], graph["r_index"][1]
    tri_rel_raw = jax.ops.segment_sum(
        graph["r_val"][:, None] * jnp.take(params["rel_emb"].astype(jnp.float32),
                                           r_cols, axis=0),
        r_rows, num_segments=triple_size)

    # Hoisted: normalise tri_rel ONCE and compute attention logits for every
    # layer of both encoders in a single Pallas pass (depends only on tri_rel).
    e_attn = jnp.concatenate([k.reshape(-1, 1) for k in params["e_attn"]], axis=1)
    r_attn = jnp.concatenate([k.reshape(-1, 1) for k in params["r_attn"]], axis=1)
    attn_mat = jnp.concatenate([e_attn, r_attn], axis=1)           # (D, 2*depth)
    L = attn_mat.shape[1]
    Lp = _round_up(max(L, 8), 8)
    attn_mat = jnp.pad(attn_mat, ((0, 0), (0, Lp - L)))
    tr, att_all = pallas_normalize_and_attention(tri_rel_raw, attn_mat)
    att_e = att_all[:, :depth]
    att_r = att_all[:, depth:2 * depth]

    out_ent, out_rel = dual_graph_attention(
        ent_feature, rel_feature, tr, att_e, att_r, graph["adj"], node_size, depth)
    emb = jnp.concatenate([out_ent, out_rel], axis=-1)   # dropout(p=0.0) == identity
    # MultiModalFusion is defined on the module but not invoked by forward().

    # ---------------- align_loss (one tiled Pallas kernel) ------------------
    l = train_pairs[:, 0]
    r = train_pairs[:, 1]
    l_emb = jnp.take(emb, l, axis=0)
    r_emb = jnp.take(emb, r, axis=0)
    lr_emb = jnp.concatenate([l_emb, r_emb], axis=0)                       # (2P, D)
    pos = jnp.sum(jnp.square(l_emb - r_emb), axis=-1, keepdims=True)       # (P, 1)
    pos2 = jnp.concatenate([pos, pos], axis=0)                             # (2P, 1)
    return pallas_align_loss(lr_emb, pos2, emb, l, r, node_size, gamma=gamma)


def xavier_uniform(key, shape):
    fan_out, fan_in = shape
    limit = math.sqrt(6.0 / (fan_in + fan_out))
    return jax.random.uniform(key, shape, jnp.float32, -limit, limit)


if __name__ == "__main__":
    # small, shape-consistent synthetic configuration
    node_size = 64          # node_size == new_node_size
    node_hidden = 32
    rel_hidden = 32
    rel_size = 16
    triple_size = 128
    depth = 2
    n_pairs = 8
    gamma = 3.0

    key = jax.random.PRNGKey(0)
    keys = jax.random.split(key, 16)

    params = {
        "ent_emb": xavier_uniform(keys[0], (node_size, node_hidden)),
        "rel_emb": xavier_uniform(keys[1], (rel_size, rel_hidden)),
        "img_emb": xavier_uniform(keys[2], (2048, node_hidden)),   # unused by forward()
        "r_attn": [xavier_uniform(keys[3 + l], (node_hidden, 1)) for l in range(depth)],
        "e_attn": [xavier_uniform(keys[5 + l], (node_hidden, 1)) for l in range(depth)],
        # MultiModalFusion.weight (unused by forward(), kept for parameter parity)
        "fusion_weight": jnp.array([1.0, 0.2], jnp.float32),
    }

    head = jax.random.randint(keys[7], (triple_size,), 0, node_size, dtype=jnp.int32)
    tail = jax.random.randint(keys[8], (triple_size,), 0, node_size, dtype=jnp.int32)
    rel_ids = jax.random.randint(keys[9], (triple_size,), 0, rel_size, dtype=jnp.int32)
    self_loop = jnp.arange(node_size, dtype=jnp.int32)

    graph = {
        "adj": jnp.stack([head, tail]),                                         # adj_matrix  [2, T]
        "r_index": jnp.stack([jnp.arange(triple_size, dtype=jnp.int32), rel_ids]),   # [2, T]
        "r_val": jnp.ones((triple_size,), jnp.float32),
        "ent_adj": jnp.stack([jnp.concatenate([self_loop, head]),
                              jnp.concatenate([self_loop, tail])]),             # ent_matrix [2, 2N]
        "rel_adj": jnp.stack([head, rel_ids]),                                  # rel_matrix [2, T]
        "img_feature": jax.random.normal(keys[10], (node_size, 2048), jnp.float32),  # unused
    }

    train_pairs = jnp.stack(
        [jax.random.randint(keys[11], (n_pairs,), 0, node_size, dtype=jnp.int32),
         jax.random.randint(keys[12], (n_pairs,), 0, node_size, dtype=jnp.int32)],
        axis=1)                                                                 # [P, 2]

    fwd = jax.jit(functools.partial(
        encoder_forward, node_size=node_size, rel_size=rel_size,
        triple_size=triple_size, depth=depth, gamma=gamma))

    loss = fwd(params, graph, train_pairs)
    jax.block_until_ready(loss)
    assert bool(jnp.isfinite(loss)), f"non-finite loss: {loss}"
    print("KERNEL_OK")
</pallas_src>

<mosaic_0001>
module attributes {stable_mosaic.version = 11 : i64} {
  func.func private @main(%arg0: i32) attributes {dimension_semantics = [#tpu.dimension_semantics<core_parallel>], iteration_bounds = array<i64: 2>, tpu.core_type = #tpu.core_type<sc_scalar_subcore>, window_params = []} {
    return
  }
}

module attributes {stable_mosaic.version = 11 : i64} {
  func.func private @main(%arg0: i32) attributes {dimension_semantics = [#tpu.dimension_semantics<core_parallel>], iteration_bounds = array<i64: 2>, tpu.core_type = #tpu.core_type<sc_scalar_subcore>, window_params = []} {
    return
  }
}

module attributes {stable_mosaic.version = 11 : i64} {
  func.func @_norm_att_kernel(%arg0: i32, %arg1: memref<128x32xf32, #tpu.memory_space<vmem>>, %arg2: memref<32x8xf32, #tpu.memory_space<vmem>>, %arg3: memref<128x32xf32, #tpu.memory_space<vmem>>, %arg4: memref<128x8xf32, #tpu.memory_space<vmem>>) attributes {dimension_semantics = [#tpu.dimension_semantics<parallel>], iteration_bounds = array<i64: 1>, scalar_prefetch = 0 : i64, scratch_operands = 0 : i64, tpu.core_type = #tpu.core_type<tc>, window_params = [{transform_indices = @transform_0, window_bounds = array<i64: 128, 32>}, {pipeline_mode = #tpu.pipeline_mode<synchronous>, transform_indices = @transform_1, window_bounds = array<i64: 32, 8>}, {transform_indices = @transform_2, window_bounds = array<i64: 128, 32>}, {transform_indices = @transform_3, window_bounds = array<i64: 128, 8>}]} {
    %c0 = arith.constant 0 : index
    %c0_0 = arith.constant 0 : index
    %0 = vector.load %arg1[%c0, %c0_0] : memref<128x32xf32, #tpu.memory_space<vmem>>, vector<128x32xf32>
    %1 = arith.mulf %0, %0 : vector<128x32xf32>
    %cst = arith.constant dense<0.000000e+00> : vector<128xf32>
    %2 = vector.multi_reduction <add>, %1, %cst [1] : vector<128x32xf32> to vector<128xf32>
    %3 = vector.shape_cast %2 : vector<128xf32> to vector<128x1xf32>
    %cst_1 = arith.constant 1.000000e-24 : f32
    %4 = vector.broadcast %cst_1 : f32 to vector<128x1xf32>
    %5 = arith.maximumf %3, %4 : vector<128x1xf32>
    %6 = math.rsqrt %5 : vector<128x1xf32>
    %7 = vector.broadcast %6 : vector<128x1xf32> to vector<128x32xf32>
    %8 = arith.mulf %0, %7 : vector<128x32xf32>
    %c0_2 = arith.constant 0 : index
    %c0_3 = arith.constant 0 : index
    %9 = vector.load %arg3[%c0_2, %c0_3] : memref<128x32xf32, #tpu.memory_space<vmem>>, vector<128x32xf32>
    tpu.vector_store %arg3[%c0_2, %c0_3], %8 {strides = array<i32>} : memref<128x32xf32, #tpu.memory_space<vmem>>, vector<128x32xf32>,
    %c0_4 = arith.constant 0 : index
    %c0_5 = arith.constant 0 : index
    %10 = vector.load %arg2[%c0_4, %c0_5] : memref<32x8xf32, #tpu.memory_space<vmem>>, vector<32x8xf32>
    %cst_6 = arith.constant dense<0.000000e+00> : vector<128x8xf32>
    %11 = tpu.matmul %8, %10, %cst_6 {dimension_numbers = #tpu.dot_dimension_numbers<[1], [0], [0], [1], [0, 0, 1, 1], [], []>} : vector<128x32xf32>, vector<32x8xf32>, vector<128x8xf32> -> vector<128x8xf32>
    %c0_7 = arith.constant 0 : index
    %c0_8 = arith.constant 0 : index
    %12 = vector.load %arg4[%c0_7, %c0_8] : memref<128x8xf32, #tpu.memory_space<vmem>>, vector<128x8xf32>
    tpu.vector_store %arg4[%c0_7, %c0_8], %11 {strides = array<i32>} : memref<128x8xf32, #tpu.memory_space<vmem>>, vector<128x8xf32>,
    return
  }
  func.func @transform_0(%arg0: i32) -> (i32, i32) {
    %c0_i32 = arith.constant 0 : i32
    %c0_i32_0 = arith.constant 0 : i32
    return %arg0, %c0_i32 : i32, i32
  }
  func.func @transform_1(%arg0: i32) -> (i32, i32) {
    %c0_i32 = arith.constant 0 : i32
    %c0_i32_0 = arith.constant 0 : i32
    %c0_i32_1 = arith.constant 0 : i32
    return %c0_i32, %c0_i32_0 : i32, i32
  }
  func.func @transform_2(%arg0: i32) -> (i32, i32) {
    %c0_i32 = arith.constant 0 : i32
    %c0_i32_0 = arith.constant 0 : i32
    return %arg0, %c0_i32 : i32, i32
  }
  func.func @transform_3(%arg0: i32) -> (i32, i32) {
    %c0_i32 = arith.constant 0 : i32
    %c0_i32_0 = arith.constant 0 : i32
    return %arg0, %c0_i32 : i32, i32
  }
}

module attributes {stable_mosaic.version = 11 : i64} {
  func.func @_reflect_kernel(%arg0: i32, %arg1: memref<128x32xf32, #tpu.memory_space<vmem>>, %arg2: memref<128x32xf32, #tpu.memory_space<vmem>>, %arg3: memref<128x32xf32, #tpu.memory_space<vmem>>, %arg4: memref<128x32xf32, #tpu.memory_space<vmem>>, %arg5: memref<128x32xf32, #tpu.memory_space<vmem>>) attributes {dimension_semantics = [#tpu.dimension_semantics<parallel>], iteration_bounds = array<i64: 1>, scalar_prefetch = 0 : i64, scratch_operands = 0 : i64, tpu.core_type = #tpu.core_type<tc>, window_params = [{transform_indices = @transform_0, window_bounds = array<i64: 128, 32>}, {transform_indices = @transform_1, window_bounds = array<i64: 128, 32>}, {transform_indices = @transform_2, window_bounds = array<i64: 128, 32>}, {transform_indices = @transform_3, window_bounds = array<i64: 128, 32>}, {transform_indices = @transform_4, window_bounds = array<i64: 128, 32>}]} {
    %c0 = arith.constant 0 : index
    %c0_0 = arith.constant 0 : index
    %0 = vector.load %arg1[%c0, %c0_0] : memref<128x32xf32, #tpu.memory_space<vmem>>, vector<128x32xf32>
    %c0_1 = arith.constant 0 : index
    %c0_2 = arith.constant 0 : index
    %1 = vector.load %arg2[%c0_1, %c0_2] : memref<128x32xf32, #tpu.memory_space<vmem>>, vector<128x32xf32>
    %c0_3 = arith.constant 0 : index
    %c0_4 = arith.constant 0 : index
    %2 = vector.load %arg3[%c0_3, %c0_4] : memref<128x32xf32, #tpu.memory_space<vmem>>, vector<128x32xf32>
    %3 = arith.mulf %1, %0 : vector<128x32xf32>
    %cst = arith.constant dense<0.000000e+00> : vector<128xf32>
    %4 = vector.multi_reduction <add>, %3, %cst [1] : vector<128x32xf32> to vector<128xf32>
    %5 = vector.shape_cast %4 : vector<128xf32> to vector<128x1xf32>
    %cst_5 = arith.constant 2.000000e+00 : f32
    %6 = vector.broadcast %cst_5 : f32 to vector<128x1xf32>
    %7 = arith.mulf %6, %5 : vector<128x1xf32>
    %8 = vector.broadcast %7 : vector<128x1xf32> to vector<128x32xf32>
    %9 = arith.mulf %8, %0 : vector<128x32xf32>
    %10 = arith.subf %1, %9 : vector<128x32xf32>
    %c0_6 = arith.constant 0 : index
    %c0_7 = arith.constant 0 : index
    %11 = vector.load %arg4[%c0_6, %c0_7] : memref<128x32xf32, #tpu.memory_space<vmem>>, vector<128x32xf32>
    tpu.vector_store %arg4[%c0_6, %c0_7], %10 {strides = array<i32>} : memref<128x32xf32, #tpu.memory_space<vmem>>, vector<128x32xf32>,
    %12 = arith.mulf %2, %0 : vector<128x32xf32>
    %cst_8 = arith.constant dense<0.000000e+00> : vector<128xf32>
    %13 = vector.multi_reduction <add>, %12, %cst_8 [1] : vector<128x32xf32> to vector<128xf32>
    %14 = vector.shape_cast %13 : vector<128xf32> to vector<128x1xf32>
    %cst_9 = arith.constant 2.000000e+00 : f32
    %15 = vector.broadcast %cst_9 : f32 to vector<128x1xf32>
    %16 = arith.mulf %15, %14 : vector<128x1xf32>
    %17 = vector.broadcast %16 : vector<128x1xf32> to vector<128x32xf32>
    %18 = arith.mulf %17, %0 : vector<128x32xf32>
    %19 = arith.subf %2, %18 : vector<128x32xf32>
    %c0_10 = arith.constant 0 : index
    %c0_11 = arith.constant 0 : index
    %20 = vector.load %arg5[%c0_10, %c0_11] : memref<128x32xf32, #tpu.memory_space<vmem>>, vector<128x32xf32>
    tpu.vector_store %arg5[%c0_10, %c0_11], %19 {strides = array<i32>} : memref<128x32xf32, #tpu.memory_space<vmem>>, vector<128x32xf32>,
    return
  }
  func.func @transform_0(%arg0: i32) -> (i32, i32) {
    %c0_i32 = arith.constant 0 : i32
    %c0_i32_0 = arith.constant 0 : i32
    return %arg0, %c0_i32 : i32, i32
  }
  func.func @transform_1(%arg0: i32) -> (i32, i32) {
    %c0_i32 = arith.constant 0 : i32
    %c0_i32_0 = arith.constant 0 : i32
    return %arg0, %c0_i32 : i32, i32
  }
  func.func @transform_2(%arg0: i32) -> (i32, i32) {
    %c0_i32 = arith.constant 0 : i32
    %c0_i32_0 = arith.constant 0 : i32
    return %arg0, %c0_i32 : i32, i32
  }
  func.func @transform_3(%arg0: i32) -> (i32, i32) {
    %c0_i32 = arith.constant 0 : i32
    %c0_i32_0 = arith.constant 0 : i32
    return %arg0, %c0_i32 : i32, i32
  }
  func.func @transform_4(%arg0: i32) -> (i32, i32) {
    %c0_i32 = arith.constant 0 : i32
    %c0_i32_0 = arith.constant 0 : i32
    return %arg0, %c0_i32 : i32, i32
  }
}

module attributes {stable_mosaic.version = 11 : i64} {
  func.func @_align_kernel(%arg0: i32, %arg1: i32, %arg2: i32, %arg3: memref<16x256xbf16, #tpu.memory_space<vmem>>, %arg4: memref<16x1xf32, #tpu.memory_space<vmem>>, %arg5: memref<16x1xf32, #tpu.memory_space<vmem>>, %arg6: memref<128x256xbf16, #tpu.memory_space<vmem>>, %arg7: memref<1x128xf32, #tpu.memory_space<vmem>>, %arg8: memref<16x1xi32, #tpu.memory_space<vmem>>, %arg9: memref<16x1xi32, #tpu.memory_space<vmem>>, %arg10: memref<16x1xf32, #tpu.memory_space<vmem>>, %arg11: memref<16x1xf32, #tpu.memory_space<vmem>>, %arg12: memref<16x1xf32, #tpu.memory_space<vmem>>, %arg13: memref<16x1xf32, #tpu.memory_space<vmem>>, %arg14: memref<16x1xf32, #tpu.memory_space<vmem>>) attributes {dimension_semantics = [#tpu.dimension_semantics<parallel>, #tpu.dimension_semantics<arbitrary>, #tpu.dimension_semantics<arbitrary>], iteration_bounds = array<i64: 1, 2, 1>, scalar_prefetch = 0 : i64, scratch_operands = 4 : i64, tpu.core_type = #tpu.core_type<tc>, window_params = [{transform_indices = @transform_0, window_bounds = array<i64: 16, 256>}, {transform_indices = @transform_1, window_bounds = array<i64: 16, 1>}, {transform_indices = @transform_2, window_bounds = array<i64: 16, 1>}, {transform_indices = @transform_3, window_bounds = array<i64: 128, 256>}, {transform_indices = @transform_4, window_bounds = array<i64: 1, 128>}, {transform_indices = @transform_5, window_bounds = array<i64: 16, 1>}, {transform_indices = @transform_6, window_bounds = array<i64: 16, 1>}, {transform_indices = @transform_7, window_bounds = array<i64: 16, 1>}]} {
    %c0 = arith.constant 0 : index
    %c0_0 = arith.constant 0 : index
    %0 = vector.load %arg3[%c0, %c0_0] : memref<16x256xbf16, #tpu.memory_space<vmem>>, vector<16x256xbf16>
    %c0_1 = arith.constant 0 : index
    %c0_2 = arith.constant 0 : index
    %1 = vector.load %arg6[%c0_1, %c0_2] : memref<128x256xbf16, #tpu.memory_space<vmem>>, vector<128x256xbf16>
    %cst = arith.constant dense<0.000000e+00> : vector<16x128xf32>
    %2 = tpu.matmul %0, %1, %cst {dimension_numbers = #tpu.dot_dimension_numbers<[1], [1], [0], [0], [0, 0, 1, 0], [], []>} : vector<16x256xbf16>, vector<128x256xbf16>, vector<16x128xf32> -> vector<16x128xf32>
    %c0_3 = arith.constant 0 : index
    %c0_4 = arith.constant 0 : index
    %3 = vector.load %arg4[%c0_3, %c0_4] : memref<16x1xf32, #tpu.memory_space<vmem>>, vector<16x1xf32>
    %c0_5 = arith.constant 0 : index
    %c0_6 = arith.constant 0 : index
    %4 = vector.load %arg7[%c0_5, %c0_6] : memref<1x128xf32, #tpu.memory_space<vmem>>, vector<1x128xf32>
    %5 = vector.broadcast %3 : vector<16x1xf32> to vector<16x128xf32>
    %6 = vector.broadcast %4 : vector<1x128xf32> to vector<16x128xf32>
    %7 = arith.addf %5, %6 : vector<16x128xf32>
    %cst_7 = arith.constant 2.000000e+00 : f32
    %8 = vector.broadcast %cst_7 : f32 to vector<16x128xf32>
    %9 = arith.mulf %8, %2 : vector<16x128xf32>
    %10 = arith.subf %7, %9 : vector<16x128xf32>
    %c128_i32 = arith.constant 128 : i32
    %11 = arith.muli %arg2, %c128_i32 : i32
    %12 = tpu.iota {dimensions = array<i32: 1>} : vector<16x128xi32>
    %13 = vector.broadcast %11 : i32 to vector<16x128xi32>
    %14 = arith.addi %13, %12 : vector<16x128xi32>
    %c0_8 = arith.constant 0 : index
    %c0_9 = arith.constant 0 : index
    %15 = vector.load %arg8[%c0_8, %c0_9] : memref<16x1xi32, #tpu.memory_space<vmem>>, vector<16x1xi32>
    %16 = vector.broadcast %15 : vector<16x1xi32> to vector<16x128xi32>
    %17 = arith.cmpi eq, %14, %16 : vector<16x128xi32>
    %18 = arith.extui %17 : vector<16x128xi1> to vector<16x128xi32>
    %19 = arith.sitofp %18 : vector<16x128xi32> to vector<16x128xf32>
    %cst_10 = arith.constant 1.000000e+00 : f32
    %20 = vector.broadcast %cst_10 : f32 to vector<16x128xf32>
    %21 = arith.subf %20, %19 : vector<16x128xf32>
    %c0_11 = arith.constant 0 : index
    %c0_12 = arith.constant 0 : index
    %22 = vector.load %arg9[%c0_11, %c0_12] : memref<16x1xi32, #tpu.memory_space<vmem>>, vector<16x1xi32>
    %23 = vector.broadcast %22 : vector<16x1xi32> to vector<16x128xi32>
    %24 = arith.cmpi eq, %14, %23 : vector<16x128xi32>
    %25 = arith.extui %24 : vector<16x128xi1> to vector<16x128xi32>
    %26 = arith.sitofp %25 : vector<16x128xi32> to vector<16x128xf32>
    %27 = arith.subf %21, %26 : vector<16x128xf32>
    %c64_i32 = arith.constant 64 : i32
    %28 = vector.broadcast %c64_i32 : i32 to vector<16x128xi32>
    %29 = arith.cmpi slt, %14, %28 : vector<16x128xi32>
    %c0_13 = arith.constant 0 : index
    %c0_14 = arith.constant 0 : index
    %30 = vector.load %arg5[%c0_13, %c0_14] : memref<16x1xf32, #tpu.memory_space<vmem>>, vector<16x1xf32>
    %31 = vector.broadcast %30 : vector<16x1xf32> to vector<16x128xf32>
    %32 = arith.subf %31, %10 : vector<16x128xf32>
    %cst_15 = arith.constant 3.000000e+00 : f32
    %33 = vector.broadcast %cst_15 : f32 to vector<16x128xf32>
    %34 = arith.addf %32, %33 : vector<16x128xf32>
    %35 = arith.mulf %34, %27 : vector<16x128xf32>
    %cst_16 = arith.constant 0.000000e+00 : f32
    %36 = vector.broadcast %cst_16 : f32 to vector<16x128xf32>
    %37 = arith.select %29, %35, %36 : vector<16x128xi1>, vector<16x128xf32>
    %c0_i32 = arith.constant 0 : i32
    %38 = arith.cmpi eq, %arg1, %c0_i32 : i32
    %c0_i32_17 = arith.constant 0 : i32
    %39 = arith.cmpi eq, %arg2, %c0_i32_17 : i32
    %40 = arith.andi %38, %39 : i1
    %41 = arith.extui %40 : i1 to i32
    %c0_i32_18 = arith.constant 0 : i32
    %42 = arith.cmpi ne, %41, %c0_i32_18 : i32
    scf.if %42 {
      %cst_22 = arith.constant 0.000000e+00 : f32
      %49 = vector.broadcast %cst_22 : f32 to vector<16x1xf32>
      %c0_23 = arith.constant 0 : index
      %c0_24 = arith.constant 0 : index
      %50 = vector.load %arg11[%c0_23, %c0_24] : memref<16x1xf32, #tpu.memory_space<vmem>>, vector<16x1xf32>
      tpu.vector_store %arg11[%c0_23, %c0_24], %49 {strides = array<i32>} : memref<16x1xf32, #tpu.memory_space<vmem>>, vector<16x1xf32>,
      %cst_25 = arith.constant 0.000000e+00 : f32
      %51 = vector.broadcast %cst_25 : f32 to vector<16x1xf32>
      %c0_26 = arith.constant 0 : index
      %c0_27 = arith.constant 0 : index
      %52 = vector.load %arg12[%c0_26, %c0_27] : memref<16x1xf32, #tpu.memory_space<vmem>>, vector<16x1xf32>
      tpu.vector_store %arg12[%c0_26, %c0_27], %51 {strides = array<i32>} : memref<16x1xf32, #tpu.memory_space<vmem>>, vector<16x1xf32>,
      %cst_28 = arith.constant 0xFF800000 : f32
      %53 = vector.broadcast %cst_28 : f32 to vector<16x1xf32>
      %c0_29 = arith.constant 0 : index
      %c0_30 = arith.constant 0 : index
      %54 = vector.load %arg13[%c0_29, %c0_30] : memref<16x1xf32, #tpu.memory_space<vmem>>, vector<16x1xf32>
      tpu.vector_store %arg13[%c0_29, %c0_30], %53 {strides = array<i32>} : memref<16x1xf32, #tpu.memory_space<vmem>>, vector<16x1xf32>,
    } else {
    }
    %c0_i32_19 = arith.constant 0 : i32
    %43 = arith.cmpi eq, %arg1, %c0_i32_19 : i32
    %44 = arith.extui %43 : i1 to i32
    %c0_i32_20 = arith.constant 0 : i32
    %45 = arith.cmpi ne, %44, %c0_i32_20 : i32
    scf.if %45 {
      %c0_22 = arith.constant 0 : index
      %c0_23 = arith.constant 0 : index
      %49 = vector.load %arg11[%c0_22, %c0_23] : memref<16x1xf32, #tpu.memory_space<vmem>>, vector<16x1xf32>
      %cst_24 = arith.constant dense<0.000000e+00> : vector<16xf32>
      %50 = vector.multi_reduction <add>, %37, %cst_24 [1] : vector<16x128xf32> to vector<16xf32>
      %51 = vector.shape_cast %50 : vector<16xf32> to vector<16x1xf32>
      %52 = arith.addf %49, %51 : vector<16x1xf32>
      %c0_25 = arith.constant 0 : index
      %c0_26 = arith.constant 0 : index
      %53 = vector.load %arg11[%c0_25, %c0_26] : memref<16x1xf32, #tpu.memory_space<vmem>>, vector<16x1xf32>
      tpu.vector_store %arg11[%c0_25, %c0_26], %52 {strides = array<i32>} : memref<16x1xf32, #tpu.memory_space<vmem>>, vector<16x1xf32>,
      %c0_27 = arith.constant 0 : index
      %c0_28 = arith.constant 0 : index
      %54 = vector.load %arg12[%c0_27, %c0_28] : memref<16x1xf32, #tpu.memory_space<vmem>>, vector<16x1xf32>
      %55 = arith.mulf %37, %37 : vector<16x128xf32>
      %cst_29 = arith.constant dense<0.000000e+00> : vector<16xf32>
      %56 = vector.multi_reduction <add>, %55, %cst_29 [1] : vector<16x128xf32> to vector<16xf32>
      %57 = vector.shape_cast %56 : vector<16xf32> to vector<16x1xf32>
      %58 = arith.addf %54, %57 : vector<16x1xf32>
      %c0_30 = arith.constant 0 : index
      %c0_31 = arith.constant 0 : index
      %59 = vector.load %arg12[%c0_30, %c0_31] : memref<16x1xf32, #tpu.memory_space<vmem>>, vector<16x1xf32>
      tpu.vector_store %arg12[%c0_30, %c0_31], %58 {strides = array<i32>} : memref<16x1xf32, #tpu.memory_space<vmem>>, vector<16x1xf32>,
      %cst_32 = arith.constant 0xFF800000 : f32
      %60 = vector.broadcast %cst_32 : f32 to vector<16x128xf32>
      %61 = arith.select %29, %37, %60 : vector<16x128xi1>, vector<16x128xf32>
      %cst_33 = arith.constant dense<0xFF800000> : vector<16xf32>
      %62 = vector.multi_reduction <maximumf>, %61, %cst_33 [1] : vector<16x128xf32> to vector<16xf32>
      %63 = vector.shape_cast %62 : vector<16xf32> to vector<16x1xf32>
      %c0_34 = arith.constant 0 : index
      %c0_35 = arith.constant 0 : index
      %64 = vector.load %arg13[%c0_34, %c0_35] : memref<16x1xf32, #tpu.memory_space<vmem>>, vector<16x1xf32>
      %65 = arith.maximumf %64, %63 : vector<16x1xf32>
      %c0_36 = arith.constant 0 : index
      %c0_37 = arith.constant 0 : index
      %66 = vector.load %arg13[%c0_36, %c0_37] : memref<16x1xf32, #tpu.memory_space<vmem>>, vector<16x1xf32>
      tpu.vector_store %arg13[%c0_36, %c0_37], %65 {strides = array<i32>} : memref<16x1xf32, #tpu.memory_space<vmem>>, vector<16x1xf32>,
    } else {
    }
    %c1_i32 = arith.constant 1 : i32
    %46 = arith.cmpi eq, %arg1, %c1_i32 : i32
    %47 = arith.extui %46 : i1 to i32
    %c0_i32_21 = arith.constant 0 : i32
    %48 = arith.cmpi ne, %47, %c0_i32_21 : i32
    scf.if %48 {
      %c0_i32_22 = arith.constant 0 : i32
      %49 = arith.cmpi eq, %arg2, %c0_i32_22 : i32
      %50 = arith.extui %49 : i1 to i32
      %c0_i32_23 = arith.constant 0 : i32
      %51 = arith.cmpi ne, %50, %c0_i32_23 : i32
      scf.if %51 {
        %cst_45 = arith.constant 0.000000e+00 : f32
        %91 = vector.broadcast %cst_45 : f32 to vector<16x1xf32>
        %c0_46 = arith.constant 0 : index
        %c0_47 = arith.constant 0 : index
        %92 = vector.load %arg14[%c0_46, %c0_47] : memref<16x1xf32, #tpu.memory_space<vmem>>, vector<16x1xf32>
        tpu.vector_store %arg14[%c0_46, %c0_47], %91 {strides = array<i32>} : memref<16x1xf32, #tpu.memory_space<vmem>>, vector<16x1xf32>,
      } else {
      }
      %c0_24 = arith.constant 0 : index
      %c0_25 = arith.constant 0 : index
      %52 = vector.load %arg11[%c0_24, %c0_25] : memref<16x1xf32, #tpu.memory_space<vmem>>, vector<16x1xf32>
      %cst_26 = arith.constant 1.562500e-02 : f32
      %53 = vector.broadcast %cst_26 : f32 to vector<16x1xf32>
      %54 = arith.mulf %52, %53 : vector<16x1xf32>
      %c0_27 = arith.constant 0 : index
      %c0_28 = arith.constant 0 : index
      %55 = vector.load %arg12[%c0_27, %c0_28] : memref<16x1xf32, #tpu.memory_space<vmem>>, vector<16x1xf32>
      %cst_29 = arith.constant 1.562500e-02 : f32
      %56 = vector.broadcast %cst_29 : f32 to vector<16x1xf32>
      %57 = arith.mulf %55, %56 : vector<16x1xf32>
      %58 = arith.mulf %54, %54 : vector<16x1xf32>
      %59 = arith.subf %57, %58 : vector<16x1xf32>
      %cst_30 = arith.constant 9.99999996E-13 : f32
      %60 = vector.broadcast %cst_30 : f32 to vector<16x1xf32>
      %61 = arith.maximumf %59, %60 : vector<16x1xf32>
      %62 = math.rsqrt %61 : vector<16x1xf32>
      %c0_31 = arith.constant 0 : index
      %c0_32 = arith.constant 0 : index
      %63 = vector.load %arg13[%c0_31, %c0_32] : memref<16x1xf32, #tpu.memory_space<vmem>>, vector<16x1xf32>
      %64 = arith.subf %63, %54 : vector<16x1xf32>
      %cst_33 = arith.constant 2.000000e+01 : f32
      %65 = vector.broadcast %cst_33 : f32 to vector<16x1xf32>
      %66 = arith.mulf %65, %64 : vector<16x1xf32>
      %67 = arith.mulf %66, %62 : vector<16x1xf32>
      %cst_34 = arith.constant 8.000000e+00 : f32
      %68 = vector.broadcast %cst_34 : f32 to vector<16x1xf32>
      %69 = arith.addf %67, %68 : vector<16x1xf32>
      %70 = vector.broadcast %54 : vector<16x1xf32> to vector<16x128xf32>
      %71 = arith.subf %37, %70 : vector<16x128xf32>
      %cst_35 = arith.constant 2.000000e+01 : f32
      %72 = vector.broadcast %cst_35 : f32 to vector<16x128xf32>
      %73 = arith.mulf %72, %71 : vector<16x128xf32>
      %74 = vector.broadcast %62 : vector<16x1xf32> to vector<16x128xf32>
      %75 = arith.mulf %73, %74 : vector<16x128xf32>
      %cst_36 = arith.constant 8.000000e+00 : f32
      %76 = vector.broadcast %cst_36 : f32 to vector<16x128xf32>
      %77 = arith.addf %75, %76 : vector<16x128xf32>
      %c0_37 = arith.constant 0 : index
      %c0_38 = arith.constant 0 : index
      %78 = vector.load %arg14[%c0_37, %c0_38] : memref<16x1xf32, #tpu.memory_space<vmem>>, vector<16x1xf32>
      %79 = vector.broadcast %69 : vector<16x1xf32> to vector<16x128xf32>
      %80 = arith.subf %77, %79 : vector<16x128xf32>
      %81 = math.exp %80 : vector<16x128xf32>
      %cst_39 = arith.constant 0.000000e+00 : f32
      %82 = vector.broadcast %cst_39 : f32 to vector<16x128xf32>
      %83 = arith.select %29, %81, %82 : vector<16x128xi1>, vector<16x128xf32>
      %cst_40 = arith.constant dense<0.000000e+00> : vector<16xf32>
      %84 = vector.multi_reduction <add>, %83, %cst_40 [1] : vector<16x128xf32> to vector<16xf32>
      %85 = vector.shape_cast %84 : vector<16xf32> to vector<16x1xf32>
      %86 = arith.addf %78, %85 : vector<16x1xf32>
      %c0_41 = arith.constant 0 : index
      %c0_42 = arith.constant 0 : index
      %87 = vector.load %arg14[%c0_41, %c0_42] : memref<16x1xf32, #tpu.memory_space<vmem>>, vector<16x1xf32>
      tpu.vector_store %arg14[%c0_41, %c0_42], %86 {strides = array<i32>} : memref<16x1xf32, #tpu.memory_space<vmem>>, vector<16x1xf32>,
      %c0_i32_43 = arith.constant 0 : i32
      %88 = arith.cmpi eq, %arg2, %c0_i32_43 : i32
      %89 = arith.extui %88 : i1 to i32
      %c0_i32_44 = arith.constant 0 : i32
      %90 = arith.cmpi ne, %89, %c0_i32_44 : i32
      scf.if %90 {
        %c0_45 = arith.constant 0 : index
        %c0_46 = arith.constant 0 : index
        %91 = vector.load %arg14[%c0_45, %c0_46] : memref<16x1xf32, #tpu.memory_space<vmem>>, vector<16x1xf32>
        %92 = math.log %91 : vector<16x1xf32>
        %93 = arith.addf %69, %92 : vector<16x1xf32>
        %c0_47 = arith.constant 0 : index
        %c0_48 = arith.constant 0 : index
        %94 = vector.load %arg10[%c0_47, %c0_48] : memref<16x1xf32, #tpu.memory_space<vmem>>, vector<16x1xf32>
        tpu.vector_store %arg10[%c0_47, %c0_48], %93 {strides = array<i32>} : memref<16x1xf32, #tpu.memory_space<vmem>>, vector<16x1xf32>,
      } else {
      }
    } else {
    }
    return
  }
  func.func @transform_0(%arg0: i32, %arg1: i32, %arg2: i32) -> (i32, i32) {
    %c0_i32 = arith.constant 0 : i32
    %c0_i32_0 = arith.constant 0 : i32
    return %arg0, %c0_i32 : i32, i32
  }
  func.func @transform_1(%arg0: i32, %arg1: i32, %arg2: i32) -> (i32, i32) {
    %c0_i32 = arith.constant 0 : i32
    %c0_i32_0 = arith.constant 0 : i32
    return %arg0, %c0_i32 : i32, i32
  }
  func.func @transform_2(%arg0: i32, %arg1: i32, %arg2: i32) -> (i32, i32) {
    %c0_i32 = arith.constant 0 : i32
    %c0_i32_0 = arith.constant 0 : i32
    return %arg0, %c0_i32 : i32, i32
  }
  func.func @transform_3(%arg0: i32, %arg1: i32, %arg2: i32) -> (i32, i32) {
    %c0_i32 = arith.constant 0 : i32
    %c0_i32_0 = arith.constant 0 : i32
    return %arg2, %c0_i32 : i32, i32
  }
  func.func @transform_4(%arg0: i32, %arg1: i32, %arg2: i32) -> (i32, i32) {
    %c0_i32 = arith.constant 0 : i32
    %c0_i32_0 = arith.constant 0 : i32
    return %c0_i32, %arg2 : i32, i32
  }
  func.func @transform_5(%arg0: i32, %arg1: i32, %arg2: i32) -> (i32, i32) {
    %c0_i32 = arith.constant 0 : i32
    %c0_i32_0 = arith.constant 0 : i32
    return %arg0, %c0_i32 : i32, i32
  }
  func.func @transform_6(%arg0: i32, %arg1: i32, %arg2: i32) -> (i32, i32) {
    %c0_i32 = arith.constant 0 : i32
    %c0_i32_0 = arith.constant 0 : i32
    return %arg0, %c0_i32 : i32, i32
  }
  func.func @transform_7(%arg0: i32, %arg1: i32, %arg2: i32) -> (i32, i32) {
    %c0_i32 = arith.constant 0 : i32
    %c0_i32_0 = arith.constant 0 : i32
    return %arg0, %c0_i32 : i32, i32
  }
}

</mosaic_0001>

<llo_original>
// kernel: encoder_forward.4
$region0: #{encoder_forward.4}
  #allocation0 [shape = 'u32[]', space=smem, size = 0x4, offset = 0x4, fixed_abs, tag = 'smem constant byte address 0x4 - core index']
  #allocation1 [shape = 'u32[144,128]{1,0:T(1,128)}', space=vmem, size = 0x12000, scoped, tag = 'internal scratch']
  %s0 = inlined_call_operand.vmem [shape: f32[128,32], index: 0, kind: input, shape index: {}]
  %s1 = inlined_call_operand.vmem [shape: f32[32,8], index: 1, kind: input, shape index: {}]
  %s2 = inlined_call_operand.vmem [shape: f32[128,32], index: 2, kind: output, shape index: {0}]
  %s3 = inlined_call_operand.vmem [shape: f32[128,8], index: 3, kind: output, shape index: {1}]
  %4 = xla_tuple %s2, %s3
  %s5 = sld [smem:[#allocation0]]
  $region26: #{encoder_forward.4} parent=0
    _
  %s7 = ssub.s32 1, %s5
  %s8 = scalar_select 0, %s7, %s5
  // Predicated region
  $region2: #{encoder_forward.4} parent=0 // pred_check
    _
  $region3: #{encoder_forward.4} parent=0 // pred_check_branch
    %10 = sbr.rel (0) target = $region5
  $region4: #{encoder_forward.4} parent=0 // pred_region
    _
  $region5: #{encoder_forward.4} parent=0 // pred_fallthru
    _
  // Predicated region
  $region6: #{encoder_forward.4} parent=0 // pred_check
    _
  $region7: #{encoder_forward.4} parent=0 // pred_check_branch
    %12 = sbr.rel (0) target = $region9
  $region8: #{encoder_forward.4} parent=0 // pred_region
    _
  $region9: #{encoder_forward.4} parent=0 // pred_fallthru
    _
  %v13 = vld [vmem:[%s0] sm:$0xff]
  %v14 = vld [vmem:[%s0 + $0x8] sm:$0xff]
  %v15 = vld [vmem:[%s0 + $0x10] sm:$0xff]
  %v16 = vld [vmem:[%s0 + $0x18] sm:$0xff]
  %v17 = vld [vmem:[%s0 + $0x20] sm:$0xff]
  %v18 = vld [vmem:[%s0 + $0x28] sm:$0xff]
  %v19 = vld [vmem:[%s0 + $0x30] sm:$0xff]
  %v20 = vld [vmem:[%s0 + $0x38] sm:$0xff]
  %v21 = vld [vmem:[%s0 + $0x40] sm:$0xff]
  %v22 = vld [vmem:[%s0 + $0x48] sm:$0xff]
  %v23 = vld [vmem:[%s0 + $0x50] sm:$0xff]
  %v24 = vld [vmem:[%s0 + $0x58] sm:$0xff]
  %v25 = vld [vmem:[%s0 + $0x60] sm:$0xff]
  %v26 = vld [vmem:[%s0 + $0x68] sm:$0xff]
  %v27 = vld [vmem:[%s0 + $0x70] sm:$0xff]
  %v28 = vld [vmem:[%s0 + $0x78] sm:$0xff]
  %v29 = vmul.f32 %v13, %v13
  %v30 = vmul.f32 %v14, %v14
  %v31 = vmul.f32 %v15, %v15
  %v32 = vmul.f32 %v16, %v16
  %v33 = vmul.f32 %v17, %v17
  %v34 = vmul.f32 %v18, %v18
  %v35 = vmul.f32 %v19, %v19
  %v36 = vmul.f32 %v20, %v20
  %v37 = vmul.f32 %v21, %v21
  %v38 = vmul.f32 %v22, %v22
  %v39 = vmul.f32 %v23, %v23
  %v40 = vmul.f32 %v24, %v24
  %v41 = vmul.f32 %v25, %v25
  %v42 = vmul.f32 %v26, %v26
  %v43 = vmul.f32 %v27, %v27
  %v44 = vmul.f32 %v28, %v28
  %vm45 = vcmask 261120
  %v46 = vsel %vm45, %v29, 0.0
  %47 = vadd.xlane.f32.xlu0 %v46
  %v48 = vpop.xlane.xlu0 %47
  %v49 = vsel %vm45, %v30, 0.0
  %50 = vadd.xlane.f32.xlu0 %v49
  %v51 = vpop.xlane.xlu0 %50
  %v52 = vsel %vm45, %v31, 0.0
  %53 = vadd.xlane.f32.xlu0 %v52
  %v54 = vpop.xlane.xlu0 %53
  %v55 = vsel %vm45, %v32, 0.0
  %56 = vadd.xlane.f32.xlu0 %v55
  %v57 = vpop.xlane.xlu0 %56
  %v58 = vsel %vm45, %v33, 0.0
  %59 = vadd.xlane.f32.xlu0 %v58
  %v60 = vpop.xlane.xlu0 %59
  %v61 = vsel %vm45, %v34, 0.0
  %62 = vadd.xlane.f32.xlu0 %v61
  %v63 = vpop.xlane.xlu0 %62
  %v64 = vsel %vm45, %v35, 0.0
  %65 = vadd.xlane.f32.xlu0 %v64
  %v66 = vpop.xlane.xlu0 %65
  %v67 = vsel %vm45, %v36, 0.0
  %68 = vadd.xlane.f32.xlu0 %v67
  %v69 = vpop.xlane.xlu0 %68
  %v70 = vsel %vm45, %v37, 0.0
  %71 = vadd.xlane.f32.xlu0 %v70
  %v72 = vpop.xlane.xlu0 %71
  %v73 = vsel %vm45, %v38, 0.0
  %74 = vadd.xlane.f32.xlu0 %v73
  %v75 = vpop.xlane.xlu0 %74
  %v76 = vsel %vm45, %v39, 0.0
  %77 = vadd.xlane.f32.xlu0 %v76
  %v78 = vpop.xlane.xlu0 %77
  %v79 = vsel %vm45, %v40, 0.0
  %80 = vadd.xlane.f32.xlu0 %v79
  %v81 = vpop.xlane.xlu0 %80
  %v82 = vsel %vm45, %v41, 0.0
  %83 = vadd.xlane.f32.xlu0 %v82
  %v84 = vpop.xlane.xlu0 %83
  %v85 = vsel %vm45, %v42, 0.0
  %86 = vadd.xlane.f32.xlu0 %v85
  %v87 = vpop.xlane.xlu0 %86
  %v88 = vsel %vm45, %v43, 0.0
  %89 = vadd.xlane.f32.xlu0 %v88
  %v90 = vpop.xlane.xlu0 %89
  %v91 = vsel %vm45, %v44, 0.0
  %92 = vadd.xlane.f32.xlu0 %v91
  %v93 = vpop.xlane.xlu0 %92
  %v94 = vmax.f32 %v48, 1e-24
  %v95 = vmax.f32 %v51, 1e-24
  %v96 = vmax.f32 %v54, 1e-24
  %v97 = vmax.f32 %v57, 1e-24
  %v98 = vmax.f32 %v60, 1e-24
  %v99 = vmax.f32 %v63, 1e-24
  %v100 = vmax.f32 %v66, 1e-24
  %v101 = vmax.f32 %v69, 1e-24
  %v102 = vmax.f32 %v72, 1e-24
  %v103 = vmax.f32 %v75, 1e-24
  %v104 = vmax.f32 %v78, 1e-24
  %v105 = vmax.f32 %v81, 1e-24
  %v106 = vmax.f32 %v84, 1e-24
  %v107 = vmax.f32 %v87, 1e-24
  %v108 = vmax.f32 %v90, 1e-24
  %v109 = vmax.f32 %v93, 1e-24
  %v110 = vrsqrt.pop %v94
  %v111 = vrsqrt.pop %v95
  %v112 = vrsqrt.pop %v96
  %v113 = vrsqrt.pop %v97
  %v114 = vrsqrt.pop %v98
  %v115 = vrsqrt.pop %v99
  %v116 = vrsqrt.pop %v100
  %v117 = vrsqrt.pop %v101
  %v118 = vrsqrt.pop %v102
  %v119 = vrsqrt.pop %v103
  %v120 = vrsqrt.pop %v104
  %v121 = vrsqrt.pop %v105
  %v122 = vrsqrt.pop %v106
  %v123 = vrsqrt.pop %v107
  %v124 = vrsqrt.pop %v108
  %v125 = vrsqrt.pop %v109
  %v126 = vmul.f32 %v13, %v110
  %v127 = vmul.f32 %v14, %v111
  %v128 = vmul.f32 %v15, %v112
  %v129 = vmul.f32 %v16, %v113
  %v130 = vmul.f32 %v17, %v114
  %v131 = vmul.f32 %v18, %v115
  %v132 = vmul.f32 %v19, %v116
  %v133 = vmul.f32 %v20, %v117
  %v134 = vmul.f32 %v21, %v118
  %v135 = vmul.f32 %v22, %v119
  %v136 = vmul.f32 %v23, %v120
  %v137 = vmul.f32 %v24, %v121
  %v138 = vmul.f32 %v25, %v122
  %v139 = vmul.f32 %v26, %v123
  %v140 = vmul.f32 %v27, %v124
  %v141 = vmul.f32 %v28, %v125
  %142 = vst.msk [vmem:[%s2] sm:$0xff] %vm45, %v126
  %143 = vst.msk [vmem:[%s2 + $0x8] sm:$0xff] %vm45, %v127
  %144 = vst.msk [vmem:[%s2 + $0x10] sm:$0xff] %vm45, %v128
  %145 = vst.msk [vmem:[%s2 + $0x18] sm:$0xff] %vm45, %v129
  %146 = vst.msk [vmem:[%s2 + $0x20] sm:$0xff] %vm45, %v130
  %147 = vst.msk [vmem:[%s2 + $0x28] sm:$0xff] %vm45, %v131
  %148 = vst.msk [vmem:[%s2 + $0x30] sm:$0xff] %vm45, %v132
  %149 = vst.msk [vmem:[%s2 + $0x38] sm:$0xff] %vm45, %v133
  %150 = vst.msk [vmem:[%s2 + $0x40] sm:$0xff] %vm45, %v134
  %151 = vst.msk [vmem:[%s2 + $0x48] sm:$0xff] %vm45, %v135
  %152 = vst.msk [vmem:[%s2 + $0x50] sm:$0xff] %vm45, %v136
  %153 = vst.msk [vmem:[%s2 + $0x58] sm:$0xff] %vm45, %v137
  %154 = vst.msk [vmem:[%s2 + $0x60] sm:$0xff] %vm45, %v138
  %155 = vst.msk [vmem:[%s2 + $0x68] sm:$0xff] %vm45, %v139
  %156 = vst.msk [vmem:[%s2 + $0x70] sm:$0xff] %vm45, %v140
  %157 = vst.msk [vmem:[%s2 + $0x78] sm:$0xff] %vm45, %v141
  %v158 = vld [vmem:[%s1] sm:$0xff]
  %v159 = vld [vmem:[%s1 + $0x8] sm:$0xff]
  %v160 = vld [vmem:[%s1 + $0x10] sm:$0xff]
  %v161 = vld [vmem:[%s1 + $0x18] sm:$0xff]
  %v163 = vsel %vm45, %v126, 0
  %v166 = vsel %vm45, %v127, 0
  %v169 = vsel %vm45, %v128, 0
  %v172 = vsel %vm45, %v129, 0
  %v175 = vsel %vm45, %v130, 0
  %v178 = vsel %vm45, %v131, 0
  %v181 = vsel %vm45, %v132, 0
  %v184 = vsel %vm45, %v133, 0
  %v187 = vsel %vm45, %v134, 0
  %v190 = vsel %vm45, %v135, 0
  %v193 = vsel %vm45, %v136, 0
  %v196 = vsel %vm45, %v137, 0
  %v199 = vsel %vm45, %v138, 0
  %v202 = vsel %vm45, %v139, 0
  %v205 = vsel %vm45, %v140, 0
  %v208 = vsel %vm45, %v141, 0
  %210 = vmatprep.subr.mxu0 0.0
  %211 = vmatpush1.msra.mxu0 %v158
  %212 = vmatprep.subr.mxu0 0.0
  %213 = vmatpush1.msra.mxu0 %v159
  %214 = vmatprep.subr.mxu0 0.0
  %215 = vmatpush1.msra.mxu0 %v160
  %216 = vmatprep.subr.mxu0 0.0
  %217 = vmatpush1.msra.mxu0 %v161
  %218 = vmatprep.subr.mxu0 0.0
  %219 = vmatpush1.msra.mxu0 0.0
  %220 = vmatprep.subr.mxu0 0.0
  %221 = vmatpush1.msra.mxu0 0.0
  %222 = vmatprep.subr.mxu0 0.0
  %223 = vmatpush1.msra.mxu0 0.0
  %224 = vmatprep.subr.mxu0 0.0
  %225 = vmatpush1.msra.mxu0 0.0
  %226 = vmatprep.subr.mxu0 0.0
  %227 = vmatpush1.msra.mxu0 0.0
  %228 = vmatprep.subr.mxu0 0.0
  %229 = vmatpush1.msra.mxu0 0.0
  %230 = vmatprep.subr.mxu0 0.0
  %231 = vmatpush1.msra.mxu0 0.0
  %232 = vmatprep.subr.mxu0 0.0
  %233 = vmatpush1.msra.mxu0 0.0
  %234 = vmatprep.subr.mxu0 0.0
  %235 = vmatpush1.msra.mxu0 0.0
  %236 = vmatprep.subr.mxu0 0.0
  %237 = vmatpush1.msra.mxu0 0.0
  %238 = vmatprep.subr.mxu0 0.0
  %239 = vmatpush1.msra.mxu0 0.0
  %240 = vmatprep.subr.mxu0 0.0
  %241 = vmatpush1.msra.mxu0 0.0
  %242 = vmatprep.subr.mxu0 0.0
  %243 = vmatpush1.msra.mxu0 0.0
  %244 = vmatprep.subr.mxu0 0.0
  %245 = vmatpush1.msra.mxu0 0.0
  %246 = vmatprep.subr.mxu0 0.0
  %247 = vmatpush1.msra.mxu0 0.0
  %248 = vmatprep.subr.mxu0 0.0
  %249 = vmatpush1.msra.mxu0 0.0
  %250 = vmatprep.subr.mxu0 0.0
  %251 = vmatpush1.msra.mxu0 0.0
  %252 = vmatprep.subr.mxu0 0.0
  %253 = vmatpush1.msra.mxu0 0.0
  %254 = vmatprep.subr.mxu0 0.0
  %255 = vmatpush1.msra.mxu0 0.0
  %256 = vmatprep.subr.mxu0 0.0
  %257 = vmatpush1.msra.mxu0 0.0
  %258 = vmatprep.subr.mxu0 0.0
  %259 = vmatpush1.msra.mxu0 0.0
  %260 = vmatprep.subr.mxu0 0.0
  %261 = vmatpush1.msra.mxu0 0.0
  %262 = vmatprep.subr.mxu0 0.0
  %263 = vmatpush1.msra.mxu0 0.0
  %264 = vmatprep.subr.mxu0 0.0
  %265 = vmatpush1.msra.mxu0 0.0
  %266 = vmatprep.subr.mxu0 0.0
  %267 = vmatpush1.msra.mxu0 0.0
  %268 = vmatprep.subr.mxu0 0.0
  %269 = vmatpush1.msra.mxu0 0.0
  %270 = vmatprep.subr.mxu0 0.0
  %271 = vmatpush1.msra.mxu0 0.0
  %272 = vmatprep.subr.mxu0 0.0
  %273 = vmatpush1.msra.mxu0 0.0
  %274 = vmatprep.mubr.f32.mxu0 0.0
  %275 = vmatmul.mubr.f32.gmra.mrb[0].mxu0 %v163
  %v276 = vpop.f32.mrb[0].mxu0
  %v277 = vadd.f32 0.0, %v276
  %v278 = vpop.f32.mrb[0].mxu0
  %279 = vmatprep.mubr.f32.mxu0 0.0
  %280 = vmatmul.mubr.f32.gmra.mrb[0].mxu0 %v166
  %v281 = vpop.f32.mrb[0].mxu0
  %v282 = vadd.f32 0.0, %v281
  %v283 = vpop.f32.mrb[0].mxu0
  %284 = vmatprep.mubr.f32.mxu0 0.0
  %285 = vmatmul.mubr.f32.gmra.mrb[0].mxu0 %v169
  %v286 = vpop.f32.mrb[0].mxu0
  %v287 = vadd.f32 0.0, %v286
  %v288 = vpop.f32.mrb[0].mxu0
  %289 = vmatprep.mubr.f32.mxu0 0.0
  %290 = vmatmul.mubr.f32.gmra.mrb[0].mxu0 %v172
  %v291 = vpop.f32.mrb[0].mxu0
  %v292 = vadd.f32 0.0, %v291
  %v293 = vpop.f32.mrb[0].mxu0
  %294 = vmatprep.mubr.f32.mxu0 0.0
  %295 = vmatmul.mubr.f32.gmra.mrb[0].mxu0 %v175
  %v296 = vpop.f32.mrb[0].mxu0
  %v297 = vadd.f32 0.0, %v296
  %v298 = vpop.f32.mrb[0].mxu0
  %299 = vmatprep.mubr.f32.mxu0 0.0
  %300 = vmatmul.mubr.f32.gmra.mrb[0].mxu0 %v178
  %v301 = vpop.f32.mrb[0].mxu0
  %v302 = vadd.f32 0.0, %v301
  %v303 = vpop.f32.mrb[0].mxu0
  %304 = vmatprep.mubr.f32.mxu0 0.0
  %305 = vmatmul.mubr.f32.gmra.mrb[0].mxu0 %v181
  %v306 = vpop.f32.mrb[0].mxu0
  %v307 = vadd.f32 0.0, %v306
  %v308 = vpop.f32.mrb[0].mxu0
  %309 = vmatprep.mubr.f32.mxu0 0.0
  %310 = vmatmul.mubr.f32.gmra.mrb[0].mxu0 %v184
  %v311 = vpop.f32.mrb[0].mxu0
  %v312 = vadd.f32 0.0, %v311
  %v313 = vpop.f32.mrb[0].mxu0
  %314 = vmatprep.mubr.f32.mxu0 0.0
  %315 = vmatmul.mubr.f32.gmra.mrb[0].mxu0 %v187
  %v316 = vpop.f32.mrb[0].mxu0
  %v317 = vadd.f32 0.0, %v316
  %v318 = vpop.f32.mrb[0].mxu0
  %319 = vmatprep.mubr.f32.mxu0 0.0
  %320 = vmatmul.mubr.f32.gmra.mrb[0].mxu0 %v190
  %v321 = vpop.f32.mrb[0].mxu0
  %v322 = vadd.f32 0.0, %v321
  %v323 = vpop.f32.mrb[0].mxu0
  %324 = vmatprep.mubr.f32.mxu0 0.0
  %325 = vmatmul.mubr.f32.gmra.mrb[0].mxu0 %v193
  %v326 = vpop.f32.mrb[0].mxu0
  %v327 = vadd.f32 0.0, %v326
  %v328 = vpop.f32.mrb[0].mxu0
  %329 = vmatprep.mubr.f32.mxu0 0.0
  %330 = vmatmul.mubr.f32.gmra.mrb[0].mxu0 %v196
  %v331 = vpop.f32.mrb[0].mxu0
  %v332 = vadd.f32 0.0, %v331
  %v333 = vpop.f32.mrb[0].mxu0
  %334 = vmatprep.mubr.f32.mxu0 0.0
  %335 = vmatmul.mubr.f32.gmra.mrb[0].mxu0 %v199
  %v336 = vpop.f32.mrb[0].mxu0
  %v337 = vadd.f32 0.0, %v336
  %v338 = vpop.f32.mrb[0].mxu0
  %339 = vmatprep.mubr.f32.mxu0 0.0
  %340 = vmatmul.mubr.f32.gmra.mrb[0].mxu0 %v202
  %v341 = vpop.f32.mrb[0].mxu0
  %v342 = vadd.f32 0.0, %v341
  %v343 = vpop.f32.mrb[0].mxu0
  %344 = vmatprep.mubr.f32.mxu0 0.0
  %345 = vmatmul.mubr.f32.gmra.mrb[0].mxu0 %v205
  %v346 = vpop.f32.mrb[0].mxu0
  %v347 = vadd.f32 0.0, %v346
  %v348 = vpop.f32.mrb[0].mxu0
  %349 = vmatprep.mubr.f32.mxu0 0.0
  %350 = vmatmul.mubr.f32.gmra.mrb[0].mxu0 %v208
  %v351 = vpop.f32.mrb[0].mxu0
  %v352 = vadd.f32 0.0, %v351
  %v353 = vpop.f32.mrb[0].mxu0
  %354 = vdwg.mxu0
  %vm355 = vcmask 64512
  %356 = vst.msk [vmem:[%s3] sm:$0xff] %vm355, %v277
  %357 = vst.msk [vmem:[%s3 + $0x8] sm:$0xff] %vm355, %v282
  %358 = vst.msk [vmem:[%s3 + $0x10] sm:$0xff] %vm355, %v287
  %359 = vst.msk [vmem:[%s3 + $0x18] sm:$0xff] %vm355, %v292
  %360 = vst.msk [vmem:[%s3 + $0x20] sm:$0xff] %vm355, %v297
  %361 = vst.msk [vmem:[%s3 + $0x28] sm:$0xff] %vm355, %v302
  %362 = vst.msk [vmem:[%s3 + $0x30] sm:$0xff] %vm355, %v307
  %363 = vst.msk [vmem:[%s3 + $0x38] sm:$0xff] %vm355, %v312
  %364 = vst.msk [vmem:[%s3 + $0x40] sm:$0xff] %vm355, %v317
  %365 = vst.msk [vmem:[%s3 + $0x48] sm:$0xff] %vm355, %v322
  %366 = vst.msk [vmem:[%s3 + $0x50] sm:$0xff] %vm355, %v327
  %367 = vst.msk [vmem:[%s3 + $0x58] sm:$0xff] %vm355, %v332
  %368 = vst.msk [vmem:[%s3 + $0x60] sm:$0xff] %vm355, %v337
  %369 = vst.msk [vmem:[%s3 + $0x68] sm:$0xff] %vm355, %v342
  %370 = vst.msk [vmem:[%s3 + $0x70] sm:$0xff] %vm355, %v347
  %371 = vst.msk [vmem:[%s3 + $0x78] sm:$0xff] %vm355, %v352
  // Predicated region
  $region10: #{encoder_forward.4} parent=0 // pred_check
    _
  $region11: #{encoder_forward.4} parent=0 // pred_check_branch
    %373 = sbr.rel (0) target = $region13
  $region12: #{encoder_forward.4} parent=0 // pred_region
    _
  $region13: #{encoder_forward.4} parent=0 // pred_fallthru
    _
  // Predicated region
  $region14: #{encoder_forward.4} parent=0 // pred_check
    _
  $region15: #{encoder_forward.4} parent=0 // pred_check_branch
    %375 = sbr.rel (0) target = $region17
  $region16: #{encoder_forward.4} parent=0 // pred_region
    _
  $region17: #{encoder_forward.4} parent=0 // pred_fallthru
    _
  // Predicated region
  $region18: #{encoder_forward.4} parent=0 // pred_check
    _
  $region19: #{encoder_forward.4} parent=0 // pred_check_branch
    %377 = sbr.rel (0) target = $region21
  $region20: #{encoder_forward.4} parent=0 // pred_region
    _
  $region21: #{encoder_forward.4} parent=0 // pred_fallthru
    _
  // Predicated region
  $region22: #{encoder_forward.4} parent=0 // pred_check
    _
  $region23: #{encoder_forward.4} parent=0 // pred_check_branch
    %379 = sbr.rel (0) target = $region25
  $region24: #{encoder_forward.4} parent=0 // pred_region
    _
  $region25: #{encoder_forward.4} parent=0 // pred_fallthru
    _

// kernel: encoder_forward.5
$region0: #{encoder_forward.5}
  #allocation0 [shape = 'u32[]', space=smem, size = 0x4, offset = 0x4, fixed_abs, tag = 'smem constant byte address 0x4 - core index']
  #allocation1 [shape = 'u32[144,128]{1,0:T(1,128)}', space=vmem, size = 0x12000, scoped, tag = 'internal scratch']
  %s0 = inlined_call_operand.vmem [shape: f32[128,32], index: 0, kind: input, shape index: {}]
  %s1 = inlined_call_operand.vmem [shape: f32[128,32], index: 1, kind: input, shape index: {}]
  %s2 = inlined_call_operand.vmem [shape: f32[128,32], index: 2, kind: input, shape index: {}]
  %s3 = inlined_call_operand.vmem [shape: f32[128,32], index: 3, kind: output, shape index: {0}]
  %s4 = inlined_call_operand.vmem [shape: f32[128,32], index: 4, kind: output, shape index: {1}]
  %5 = xla_tuple %s3, %s4
  %s6 = sld [smem:[#allocation0]]
  $region30: #{encoder_forward.5} parent=0
    _
  %s8 = ssub.s32 1, %s6
  %s9 = scalar_select 0, %s8, %s6
  // Predicated region
  $region2: #{encoder_forward.5} parent=0 // pred_check
    _
  $region3: #{encoder_forward.5} parent=0 // pred_check_branch
    %11 = sbr.rel (0) target = $region5
  $region4: #{encoder_forward.5} parent=0 // pred_region
    _
  $region5: #{encoder_forward.5} parent=0 // pred_fallthru
    _
  // Predicated region
  $region6: #{encoder_forward.5} parent=0 // pred_check
    _
  $region7: #{encoder_forward.5} parent=0 // pred_check_branch
    %13 = sbr.rel (0) target = $region9
  $region8: #{encoder_forward.5} parent=0 // pred_region
    _
  $region9: #{encoder_forward.5} parent=0 // pred_fallthru
    _
  // Predicated region
  $region10: #{encoder_forward.5} parent=0 // pred_check
    _
  $region11: #{encoder_forward.5} parent=0 // pred_check_branch
    %15 = sbr.rel (0) target = $region13
  $region12: #{encoder_forward.5} parent=0 // pred_region
    _
  $region13: #{encoder_forward.5} parent=0 // pred_fallthru
    _
  %v16 = vld [vmem:[%s0] sm:$0xff]
  %v17 = vld [vmem:[%s0 + $0x8] sm:$0xff]
  %v18 = vld [vmem:[%s0 + $0x10] sm:$0xff]
  %v19 = vld [vmem:[%s0 + $0x18] sm:$0xff]
  %v20 = vld [vmem:[%s0 + $0x20] sm:$0xff]
  %v21 = vld [vmem:[%s0 + $0x28] sm:$0xff]
  %v22 = vld [vmem:[%s0 + $0x30] sm:$0xff]
  %v23 = vld [vmem:[%s0 + $0x38] sm:$0xff]
  %v24 = vld [vmem:[%s0 + $0x40] sm:$0xff]
  %v25 = vld [vmem:[%s0 + $0x48] sm:$0xff]
  %v26 = vld [vmem:[%s0 + $0x50] sm:$0xff]
  %v27 = vld [vmem:[%s0 + $0x58] sm:$0xff]
  %v28 = vld [vmem:[%s0 + $0x60] sm:$0xff]
  %v29 = vld [vmem:[%s0 + $0x68] sm:$0xff]
  %v30 = vld [vmem:[%s0 + $0x70] sm:$0xff]
  %v31 = vld [vmem:[%s0 + $0x78] sm:$0xff]
  %v32 = vld [vmem:[%s1] sm:$0xff]
  %v33 = vld [vmem:[%s1 + $0x8] sm:$0xff]
  %v34 = vld [vmem:[%s1 + $0x10] sm:$0xff]
  %v35 = vld [vmem:[%s1 + $0x18] sm:$0xff]
  %v36 = vld [vmem:[%s1 + $0x20] sm:$0xff]
  %v37 = vld [vmem:[%s1 + $0x28] sm:$0xff]
  %v38 = vld [vmem:[%s1 + $0x30] sm:$0xff]
  %v39 = vld [vmem:[%s1 + $0x38] sm:$0xff]
  %v40 = vld [vmem:[%s1 + $0x40] sm:$0xff]
  %v41 = vld [vmem:[%s1 + $0x48] sm:$0xff]
  %v42 = vld [vmem:[%s1 + $0x50] sm:$0xff]
  %v43 = vld [vmem:[%s1 + $0x58] sm:$0xff]
  %v44 = vld [vmem:[%s1 + $0x60] sm:$0xff]
  %v45 = vld [vmem:[%s1 + $0x68] sm:$0xff]
  %v46 = vld [vmem:[%s1 + $0x70] sm:$0xff]
  %v47 = vld [vmem:[%s1 + $0x78] sm:$0xff]
  %v48 = vld [vmem:[%s2] sm:$0xff]
  %v49 = vld [vmem:[%s2 + $0x8] sm:$0xff]
  %v50 = vld [vmem:[%s2 + $0x10] sm:$0xff]
  %v51 = vld [vmem:[%s2 + $0x18] sm:$0xff]
  %v52 = vld [vmem:[%s2 + $0x20] sm:$0xff]
  %v53 = vld [vmem:[%s2 + $0x28] sm:$0xff]
  %v54 = vld [vmem:[%s2 + $0x30] sm:$0xff]
  %v55 = vld [vmem:[%s2 + $0x38] sm:$0xff]
  %v56 = vld [vmem:[%s2 + $0x40] sm:$0xff]
  %v57 = vld [vmem:[%s2 + $0x48] sm:$0xff]
  %v58 = vld [vmem:[%s2 + $0x50] sm:$0xff]
  %v59 = vld [vmem:[%s2 + $0x58] sm:$0xff]
  %v60 = vld [vmem:[%s2 + $0x60] sm:$0xff]
  %v61 = vld [vmem:[%s2 + $0x68] sm:$0xff]
  %v62 = vld [vmem:[%s2 + $0x70] sm:$0xff]
  %v63 = vld [vmem:[%s2 + $0x78] sm:$0xff]
  %v64 = vmul.f32 %v32, %v16
  %v65 = vmul.f32 %v33, %v17
  %v66 = vmul.f32 %v34, %v18
  %v67 = vmul.f32 %v35, %v19
  %v68 = vmul.f32 %v36, %v20
  %v69 = vmul.f32 %v37, %v21
  %v70 = vmul.f32 %v38, %v22
  %v71 = vmul.f32 %v39, %v23
  %v72 = vmul.f32 %v40, %v24
  %v73 = vmul.f32 %v41, %v25
  %v74 = vmul.f32 %v42, %v26
  %v75 = vmul.f32 %v43, %v27
  %v76 = vmul.f32 %v44, %v28
  %v77 = vmul.f32 %v45, %v29
  %v78 = vmul.f32 %v46, %v30
  %v79 = vmul.f32 %v47, %v31
  %vm80 = vcmask 261120
  %v81 = vsel %vm80, %v64, 0.0
  %82 = vadd.xlane.f32.xlu0 %v81
  %v83 = vpop.xlane.xlu0 %82
  %v84 = vsel %vm80, %v65, 0.0
  %85 = vadd.xlane.f32.xlu0 %v84
  %v86 = vpop.xlane.xlu0 %85
  %v87 = vsel %vm80, %v66, 0.0
  %88 = vadd.xlane.f32.xlu0 %v87
  %v89 = vpop.xlane.xlu0 %88
  %v90 = vsel %vm80, %v67, 0.0
  %91 = vadd.xlane.f32.xlu0 %v90
  %v92 = vpop.xlane.xlu0 %91
  %v93 = vsel %vm80, %v68, 0.0
  %94 = vadd.xlane.f32.xlu0 %v93
  %v95 = vpop.xlane.xlu0 %94
  %v96 = vsel %vm80, %v69, 0.0
  %97 = vadd.xlane.f32.xlu0 %v96
  %v98 = vpop.xlane.xlu0 %97
  %v99 = vsel %vm80, %v70, 0.0
  %100 = vadd.xlane.f32.xlu0 %v99
  %v101 = vpop.xlane.xlu0 %100
  %v102 = vsel %vm80, %v71, 0.0
  %103 = vadd.xlane.f32.xlu0 %v102
  %v104 = vpop.xlane.xlu0 %103
  %v105 = vsel %vm80, %v72, 0.0
  %106 = vadd.xlane.f32.xlu0 %v105
  %v107 = vpop.xlane.xlu0 %106
  %v108 = vsel %vm80, %v73, 0.0
  %109 = vadd.xlane.f32.xlu0 %v108
  %v110 = vpop.xlane.xlu0 %109
  %v111 = vsel %vm80, %v74, 0.0
  %112 = vadd.xlane.f32.xlu0 %v111
  %v113 = vpop.xlane.xlu0 %112
  %v114 = vsel %vm80, %v75, 0.0
  %115 = vadd.xlane.f32.xlu0 %v114
  %v116 = vpop.xlane.xlu0 %115
  %v117 = vsel %vm80, %v76, 0.0
  %118 = vadd.xlane.f32.xlu0 %v117
  %v119 = vpop.xlane.xlu0 %118
  %v120 = vsel %vm80, %v77, 0.0
  %121 = vadd.xlane.f32.xlu0 %v120
  %v122 = vpop.xlane.xlu0 %121
  %v123 = vsel %vm80, %v78, 0.0
  %124 = vadd.xlane.f32.xlu0 %v123
  %v125 = vpop.xlane.xlu0 %124
  %v126 = vsel %vm80, %v79, 0.0
  %127 = vadd.xlane.f32.xlu0 %v126
  %v128 = vpop.xlane.xlu0 %127
  %v129 = vmul.f32 %v83, 2.0
  %v130 = vmul.f32 %v86, 2.0
  %v131 = vmul.f32 %v89, 2.0
  %v132 = vmul.f32 %v92, 2.0
  %v133 = vmul.f32 %v95, 2.0
  %v134 = vmul.f32 %v98, 2.0
  %v135 = vmul.f32 %v101, 2.0
  %v136 = vmul.f32 %v104, 2.0
  %v137 = vmul.f32 %v107, 2.0
  %v138 = vmul.f32 %v110, 2.0
  %v139 = vmul.f32 %v113, 2.0
  %v140 = vmul.f32 %v116, 2.0
  %v141 = vmul.f32 %v119, 2.0
  %v142 = vmul.f32 %v122, 2.0
  %v143 = vmul.f32 %v125, 2.0
  %v144 = vmul.f32 %v128, 2.0
  %v145 = vmul.f32 %v129, %v16
  %v146 = vmul.f32 %v130, %v17
  %v147 = vmul.f32 %v131, %v18
  %v148 = vmul.f32 %v132, %v19
  %v149 = vmul.f32 %v133, %v20
  %v150 = vmul.f32 %v134, %v21
  %v151 = vmul.f32 %v135, %v22
  %v152 = vmul.f32 %v136, %v23
  %v153 = vmul.f32 %v137, %v24
  %v154 = vmul.f32 %v138, %v25
  %v155 = vmul.f32 %v139, %v26
  %v156 = vmul.f32 %v140, %v27
  %v157 = vmul.f32 %v141, %v28
  %v158 = vmul.f32 %v142, %v29
  %v159 = vmul.f32 %v143, %v30
  %v160 = vmul.f32 %v144, %v31
  %v161 = vsub.f32 %v32, %v145
  %v162 = vsub.f32 %v33, %v146
  %v163 = vsub.f32 %v34, %v147
  %v164 = vsub.f32 %v35, %v148
  %v165 = vsub.f32 %v36, %v149
  %v166 = vsub.f32 %v37, %v150
  %v167 = vsub.f32 %v38, %v151
  %v168 = vsub.f32 %v39, %v152
  %v169 = vsub.f32 %v40, %v153
  %v170 = vsub.f32 %v41, %v154
  %v171 = vsub.f32 %v42, %v155
  %v172 = vsub.f32 %v43, %v156
  %v173 = vsub.f32 %v44, %v157
  %v174 = vsub.f32 %v45, %v158
  %v175 = vsub.f32 %v46, %v159
  %v176 = vsub.f32 %v47, %v160
  %177 = vst.msk [vmem:[%s3] sm:$0xff] %vm80, %v161
  %178 = vst.msk [vmem:[%s3 + $0x8] sm:$0xff] %vm80, %v162
  %179 = vst.msk [vmem:[%s3 + $0x10] sm:$0xff] %vm80, %v163
  %180 = vst.msk [vmem:[%s3 + $0x18] sm:$0xff] %vm80, %v164
  %181 = vst.msk [vmem:[%s3 + $0x20] sm:$0xff] %vm80, %v165
  %182 = vst.msk [vmem:[%s3 + $0x28] sm:$0xff] %vm80, %v166
  %183 = vst.msk [vmem:[%s3 + $0x30] sm:$0xff] %vm80, %v167
  %184 = vst.msk [vmem:[%s3 + $0x38] sm:$0xff] %vm80, %v168
  %185 = vst.msk [vmem:[%s3 + $0x40] sm:$0xff] %vm80, %v169
  %186 = vst.msk [vmem:[%s3 + $0x48] sm:$0xff] %vm80, %v170
  %187 = vst.msk [vmem:[%s3 + $0x50] sm:$0xff] %vm80, %v171
  %188 = vst.msk [vmem:[%s3 + $0x58] sm:$0xff] %vm80, %v172
  %189 = vst.msk [vmem:[%s3 + $0x60] sm:$0xff] %vm80, %v173
  %190 = vst.msk [vmem:[%s3 + $0x68] sm:$0xff] %vm80, %v174
  %191 = vst.msk [vmem:[%s3 + $0x70] sm:$0xff] %vm80, %v175
  %192 = vst.msk [vmem:[%s3 + $0x78] sm:$0xff] %vm80, %v176
  %v193 = vmul.f32 %v48, %v16
  %v194 = vmul.f32 %v49, %v17
  %v195 = vmul.f32 %v50, %v18
  %v196 = vmul.f32 %v51, %v19
  %v197 = vmul.f32 %v52, %v20
  %v198 = vmul.f32 %v53, %v21
  %v199 = vmul.f32 %v54, %v22
  %v200 = vmul.f32 %v55, %v23
  %v201 = vmul.f32 %v56, %v24
  %v202 = vmul.f32 %v57, %v25
  %v203 = vmul.f32 %v58, %v26
  %v204 = vmul.f32 %v59, %v27
  %v205 = vmul.f32 %v60, %v28
  %v206 = vmul.f32 %v61, %v29
  %v207 = vmul.f32 %v62, %v30
  %v208 = vmul.f32 %v63, %v31
  %v209 = vsel %vm80, %v193, 0.0
  %210 = vadd.xlane.f32.xlu0 %v209
  %v211 = vpop.xlane.xlu0 %210
  %v212 = vsel %vm80, %v194, 0.0
  %213 = vadd.xlane.f32.xlu0 %v212
  %v214 = vpop.xlane.xlu0 %213
  %v215 = vsel %vm80, %v195, 0.0
  %216 = vadd.xlane.f32.xlu0 %v215
  %v217 = vpop.xlane.xlu0 %216
  %v218 = vsel %vm80, %v196, 0.0
  %219 = vadd.xlane.f32.xlu0 %v218
  %v220 = vpop.xlane.xlu0 %219
  %v221 = vsel %vm80, %v197, 0.0
  %222 = vadd.xlane.f32.xlu0 %v221
  %v223 = vpop.xlane.xlu0 %222
  %v224 = vsel %vm80, %v198, 0.0
  %225 = vadd.xlane.f32.xlu0 %v224
  %v226 = vpop.xlane.xlu0 %225
  %v227 = vsel %vm80, %v199, 0.0
  %228 = vadd.xlane.f32.xlu0 %v227
  %v229 = vpop.xlane.xlu0 %228
  %v230 = vsel %vm80, %v200, 0.0
  %231 = vadd.xlane.f32.xlu0 %v230
  %v232 = vpop.xlane.xlu0 %231
  %v233 = vsel %vm80, %v201, 0.0
  %234 = vadd.xlane.f32.xlu0 %v233
  %v235 = vpop.xlane.xlu0 %234
  %v236 = vsel %vm80, %v202, 0.0
  %237 = vadd.xlane.f32.xlu0 %v236
  %v238 = vpop.xlane.xlu0 %237
  %v239 = vsel %vm80, %v203, 0.0
  %240 = vadd.xlane.f32.xlu0 %v239
  %v241 = vpop.xlane.xlu0 %240
  %v242 = vsel %vm80, %v204, 0.0
  %243 = vadd.xlane.f32.xlu0 %v242
  %v244 = vpop.xlane.xlu0 %243
  %v245 = vsel %vm80, %v205, 0.0
  %246 = vadd.xlane.f32.xlu0 %v245
  %v247 = vpop.xlane.xlu0 %246
  %v248 = vsel %vm80, %v206, 0.0
  %249 = vadd.xlane.f32.xlu0 %v248
  %v250 = vpop.xlane.xlu0 %249
  %v251 = vsel %vm80, %v207, 0.0
  %252 = vadd.xlane.f32.xlu0 %v251
  %v253 = vpop.xlane.xlu0 %252
  %v254 = vsel %vm80, %v208, 0.0
  %255 = vadd.xlane.f32.xlu0 %v254
  %v256 = vpop.xlane.xlu0 %255
  %v257 = vmul.f32 %v211, 2.0
  %v258 = vmul.f32 %v214, 2.0
  %v259 = vmul.f32 %v217, 2.0
  %v260 = vmul.f32 %v220, 2.0
  %v261 = vmul.f32 %v223, 2.0
  %v262 = vmul.f32 %v226, 2.0
  %v263 = vmul.f32 %v229, 2.0
  %v264 = vmul.f32 %v232, 2.0
  %v265 = vmul.f32 %v235, 2.0
  %v266 = vmul.f32 %v238, 2.0
  %v267 = vmul.f32 %v241, 2.0
  %v268 = vmul.f32 %v244, 2.0
  %v269 = vmul.f32 %v247, 2.0
  %v270 = vmul.f32 %v250, 2.0
  %v271 = vmul.f32 %v253, 2.0
  %v272 = vmul.f32 %v256, 2.0
  %v273 = vmul.f32 %v257, %v16
  %v274 = vmul.f32 %v258, %v17
  %v275 = vmul.f32 %v259, %v18
  %v276 = vmul.f32 %v260, %v19
  %v277 = vmul.f32 %v261, %v20
  %v278 = vmul.f32 %v262, %v21
  %v279 = vmul.f32 %v263, %v22
  %v280 = vmul.f32 %v264, %v23
  %v281 = vmul.f32 %v265, %v24
  %v282 = vmul.f32 %v266, %v25
  %v283 = vmul.f32 %v267, %v26
  %v284 = vmul.f32 %v268, %v27
  %v285 = vmul.f32 %v269, %v28
  %v286 = vmul.f32 %v270, %v29
  %v287 = vmul.f32 %v271, %v30
  %v288 = vmul.f32 %v272, %v31
  %v289 = vsub.f32 %v48, %v273
  %v290 = vsub.f32 %v49, %v274
  %v291 = vsub.f32 %v50, %v275
  %v292 = vsub.f32 %v51, %v276
  %v293 = vsub.f32 %v52, %v277
  %v294 = vsub.f32 %v53, %v278
  %v295 = vsub.f32 %v54, %v279
  %v296 = vsub.f32 %v55, %v280
  %v297 = vsub.f32 %v56, %v281
  %v298 = vsub.f32 %v57, %v282
  %v299 = vsub.f32 %v58, %v283
  %v300 = vsub.f32 %v59, %v284
  %v301 = vsub.f32 %v60, %v285
  %v302 = vsub.f32 %v61, %v286
  %v303 = vsub.f32 %v62, %v287
  %v304 = vsub.f32 %v63, %v288
  %305 = vst.msk [vmem:[%s4] sm:$0xff] %vm80, %v289
  %306 = vst.msk [vmem:[%s4 + $0x8] sm:$0xff] %vm80, %v290
  %307 = vst.msk [vmem:[%s4 + $0x10] sm:$0xff] %vm80, %v291
  %308 = vst.msk [vmem:[%s4 + $0x18] sm:$0xff] %vm80, %v292
  %309 = vst.msk [vmem:[%s4 + $0x20] sm:$0xff] %vm80, %v293
  %310 = vst.msk [vmem:[%s4 + $0x28] sm:$0xff] %vm80, %v294
  %311 = vst.msk [vmem:[%s4 + $0x30] sm:$0xff] %vm80, %v295
  %312 = vst.msk [vmem:[%s4 + $0x38] sm:$0xff] %vm80, %v296
  %313 = vst.msk [vmem:[%s4 + $0x40] sm:$0xff] %vm80, %v297
  %314 = vst.msk [vmem:[%s4 + $0x48] sm:$0xff] %vm80, %v298
  %315 = vst.msk [vmem:[%s4 + $0x50] sm:$0xff] %vm80, %v299
  %316 = vst.msk [vmem:[%s4 + $0x58] sm:$0xff] %vm80, %v300
  %317 = vst.msk [vmem:[%s4 + $0x60] sm:$0xff] %vm80, %v301
  %318 = vst.msk [vmem:[%s4 + $0x68] sm:$0xff] %vm80, %v302
  %319 = vst.msk [vmem:[%s4 + $0x70] sm:$0xff] %vm80, %v303
  %320 = vst.msk [vmem:[%s4 + $0x78] sm:$0xff] %vm80, %v304
  // Predicated region
  $region14: #{encoder_forward.5} parent=0 // pred_check
    _
  $region15: #{encoder_forward.5} parent=0 // pred_check_branch
    %322 = sbr.rel (0) target = $region17
  $region16: #{encoder_forward.5} parent=0 // pred_region
    _
  $region17: #{encoder_forward.5} parent=0 // pred_fallthru
    _
  // Predicated region
  $region18: #{encoder_forward.5} parent=0 // pred_check
    _
  $region19: #{encoder_forward.5} parent=0 // pred_check_branch
    %324 = sbr.rel (0) target = $region21
  $region20: #{encoder_forward.5} parent=0 // pred_region
    _
  $region21: #{encoder_forward.5} parent=0 // pred_fallthru
    _
  // Predicated region
  $region22: #{encoder_forward.5} parent=0 // pred_check
    _
  $region23: #{encoder_forward.5} parent=0 // pred_check_branch
    %326 = sbr.rel (0) target = $region25
  $region24: #{encoder_forward.5} parent=0 // pred_region
    _
  $region25: #{encoder_forward.5} parent=0 // pred_fallthru
    _
  // Predicated region
  $region26: #{encoder_forward.5} parent=0 // pred_check
    _
  $region27: #{encoder_forward.5} parent=0 // pred_check_branch
    %328 = sbr.rel (0) target = $region29
  $region28: #{encoder_forward.5} parent=0 // pred_region
    _
  $region29: #{encoder_forward.5} parent=0 // pred_fallthru
    _

// kernel: encoder_forward.7
$region0: #{encoder_forward.7}
  #allocation0 [shape = 'u32[]', space=smem, size = 0x4, offset = 0x4, fixed_abs, tag = 'smem constant byte address 0x4 - core index']
  #allocation1 [shape = 'u32[144,128]{1,0:T(1,128)}', space=vmem, size = 0x12000, scoped, tag = 'internal scratch']
  #allocation2 [shape = 'f32[16,1]{1,0:T(8,128)}', space=vmem, size = 0x2000, scoped, tag = 'scratch operand']
  #allocation3 [shape = 'f32[16,1]{1,0:T(8,128)}', space=vmem, size = 0x2000, scoped, tag = 'scratch operand']
  #allocation4 [shape = 'f32[16,1]{1,0:T(8,128)}', space=vmem, size = 0x2000, scoped, tag = 'scratch operand']
  #allocation5 [shape = 'f32[16,1]{1,0:T(8,128)}', space=vmem, size = 0x2000, scoped, tag = 'scratch operand']
  %s0 = inlined_call_operand.vmem [shape: bf16[16,256], index: 0, kind: input, shape index: {}]
  %s1 = inlined_call_operand.vmem [shape: f32[16,1], index: 1, kind: input, shape index: {}]
  %s2 = inlined_call_operand.vmem [shape: f32[16,1], index: 2, kind: input, shape index: {}]
  %s3 = inlined_call_operand.vmem [shape: bf16[128,256], index: 3, kind: input, shape index: {}]
  %s4 = inlined_call_operand.vmem [shape: f32[1,128], index: 4, kind: input, shape index: {}]
  %s5 = inlined_call_operand.vmem [shape: s32[16,1], index: 5, kind: input, shape index: {}]
  %s6 = inlined_call_operand.vmem [shape: s32[16,1], index: 6, kind: input, shape index: {}]
  %s7 = inlined_call_operand.vmem [shape: f32[16,1], index: 7, kind: output, shape index: {}]
  %s8 = sld [smem:[#allocation0]]
  $region81: #{encoder_forward.7} parent=0
    _
  %s10 = ssub.s32 1, %s8
  %s11 = scalar_select 0, %s10, %s8
  loop: start=0, step=1, limit=4
  $region2: #{encoder_forward.7} parent=0 // loop_pre_header
    _
  $region3: #{encoder_forward.7} parent=0 // loop_header
    %s13 = sphi 0, %s17
    %p14 = scmp.ge.s32.totalorder %s13, 4
    %s20 = sphi 0, %s39
    %s21 = sphi 0, %s35
    %s22 = sphi 0, %s31
    %s23 = sphi 0, %s20
    %s24 = sphi 0, %s21
    %s25 = sphi 0, %s22
    %s26 = sphi 0, %s23
    %s27 = sphi 0, %s24
    %s28 = sphi 0, %s25
    %s42 = sphi 0, %s44
    %s45 = sphi 0, %s42
    %s46 = sphi 0, %s45
    %s62 = sphi 0, %s46
    %s68 = sphi 0, %s70
    %s71 = sphi 0, %s68
    %s72 = sphi 0, %s71
    %s88 = sphi 0, %s72
    %s94 = sphi 0, %s96
    %s97 = sphi 0, %s94
    %s98 = sphi 0, %s97
    %s114 = sphi 0, %s98
    %s120 = sphi 0, %s122
    %s123 = sphi 0, %s120
    %s124 = sphi 0, %s123
    %s140 = sphi 0, %s124
    %s146 = sphi 0, %s148
    %s149 = sphi 0, %s146
    %s150 = sphi 0, %s149
    %s166 = sphi 0, %s150
    %s172 = sphi 0, %s174
    %s175 = sphi 0, %s172
    %s176 = sphi 0, %s175
    %s192 = sphi 0, %s176
    %s198 = sphi 0, %s200
    %s201 = sphi 0, %s198
    %s202 = sphi 0, %s201
    %s218 = sphi 0, %s202
    %s224 = sphi 0, %s226
    %s227 = sphi 0, %s224
    %s228 = sphi 0, %s227
    %s244 = sphi 0, %s228
  $region4: #{encoder_forward.7} parent=0 // loop_header_branch
    %16 = sbr.rel (%p14) target = $region8
  $region5: #{encoder_forward.7} parent=0 // loop_body
    %s18 = ssub.s32 %s13, 1
    %s19 = ssub.s32 %s13, 2
    %s29 = sadd.s32 1, %s22
    %p30 = scmp.ge.s32.totalorder %s29, 1
    %s31 = scalar_select %p30, 0, %s29
    %s32 = sadd.s32 1, %s21
    %s33 = scalar_select %p30, %s32, %s21
    %p34 = scmp.ge.s32.totalorder %s33, 2
    %s35 = scalar_select %p34, 0, %s33
    %s36 = sadd.s32 1, %s20
    %s37 = scalar_select %p34, %s36, %s20
    %p38 = scmp.ge.s32.totalorder %s37, 1
    %s39 = scalar_select %p38, 0, %s37
    %s40 = ssub.s32 %s20, %s39
    %p41 = scmp.eq.s32.totalorder %s40, 0
    %s43 = sadd.s32 %s42, 1
    %s44 = scalar_select %p41, %s42, %s43
    %p47 = pneg %p41
    %p48 = scmp.eq.s32.totalorder %s13, 1
    %p49 = por %p47, %p48
    %p50 = scmp.ne.s32.totalorder %s42, %s45
    %p51 = scmp.eq.s32.totalorder %s13, 0
    %p52 = por %p50, %p51
    %p53 = scmp.ne.s32.totalorder %s42, %s45
    %p54 = scmp.eq.s32.totalorder %s18, 1
    %p55 = por %p53, %p54
    %p56 = scmp.ne.s32.totalorder %s45, %s46
    %p57 = scmp.eq.s32.totalorder %s18, 0
    %p58 = por %p56, %p57
    %p59 = scmp.ne.s32.totalorder %s45, %s46
    %p60 = scmp.eq.s32.totalorder %s19, 1
    %p61 = por %p59, %p60
    %p63 = scmp.ne.s32.totalorder %s46, %s62
    %p64 = scmp.eq.s32.totalorder %s19, 0
    %p65 = por %p63, %p64
    %s66 = ssub.s32 %s20, %s39
    %p67 = scmp.eq.s32.totalorder %s66, 0
    %s69 = sadd.s32 %s68, 1
    %s70 = scalar_select %p67, %s68, %s69
    %p73 = pneg %p67
    %p74 = scmp.eq.s32.totalorder %s13, 1
    %p75 = por %p73, %p74
    %p76 = scmp.ne.s32.totalorder %s68, %s71
    %p77 = scmp.eq.s32.totalorder %s13, 0
    %p78 = por %p76, %p77
    %p79 = scmp.ne.s32.totalorder %s68, %s71
    %p80 = scmp.eq.s32.totalorder %s18, 1
    %p81 = por %p79, %p80
    %p82 = scmp.ne.s32.totalorder %s71, %s72
    %p83 = scmp.eq.s32.totalorder %s18, 0
    %p84 = por %p82, %p83
    %p85 = scmp.ne.s32.totalorder %s71, %s72
    %p86 = scmp.eq.s32.totalorder %s19, 1
    %p87 = por %p85, %p86
    %p89 = scmp.ne.s32.totalorder %s72, %s88
    %p90 = scmp.eq.s32.totalorder %s19, 0
    %p91 = por %p89, %p90
    %s92 = ssub.s32 %s20, %s39
    %p93 = scmp.eq.s32.totalorder %s92, 0
    %s95 = sadd.s32 %s94, 1
    %s96 = scalar_select %p93, %s94, %s95
    %p99 = pneg %p93
    %p100 = scmp.eq.s32.totalorder %s13, 1
    %p101 = por %p99, %p100
    %p102 = scmp.ne.s32.totalorder %s94, %s97
    %p103 = scmp.eq.s32.totalorder %s13, 0
    %p104 = por %p102, %p103
    %p105 = scmp.ne.s32.totalorder %s94, %s97
    %p106 = scmp.eq.s32.totalorder %s18, 1
    %p107 = por %p105, %p106
    %p108 = scmp.ne.s32.totalorder %s97, %s98
    %p109 = scmp.eq.s32.totalorder %s18, 0
    %p110 = por %p108, %p109
    %p111 = scmp.ne.s32.totalorder %s97, %s98
    %p112 = scmp.eq.s32.totalorder %s19, 1
    %p113 = por %p111, %p112
    %p115 = scmp.ne.s32.totalorder %s98, %s114
    %p116 = scmp.eq.s32.totalorder %s19, 0
    %p117 = por %p115, %p116
    %s118 = ssub.s32 %s22, %s31
    %p119 = scmp.eq.s32.totalorder %s118, 0
    %s121 = sadd.s32 %s120, 1
    %s122 = scalar_select %p119, %s120, %s121
    %p125 = pneg %p119
    %p126 = scmp.eq.s32.totalorder %s13, 1
    %p127 = por %p125, %p126
    %p128 = scmp.ne.s32.totalorder %s120, %s123
    %p129 = scmp.eq.s32.totalorder %s13, 0
    %p130 = por %p128, %p129
    %p131 = scmp.ne.s32.totalorder %s120, %s123
    %p132 = scmp.eq.s32.totalorder %s18, 1
    %p133 = por %p131, %p132
    %p134 = scmp.ne.s32.totalorder %s123, %s124
    %p135 = scmp.eq.s32.totalorder %s18, 0
    %p136 = por %p134, %p135
    %p137 = scmp.ne.s32.totalorder %s123, %s124
    %p138 = scmp.eq.s32.totalorder %s19, 1
    %p139 = por %p137, %p138
    %p141 = scmp.ne.s32.totalorder %s124, %s140
    %p142 = scmp.eq.s32.totalorder %s19, 0
    %p143 = por %p141, %p142
    %s144 = ssub.s32 %s22, %s31
    %p145 = scmp.eq.s32.totalorder %s144, 0
    %s147 = sadd.s32 %s146, 1
    %s148 = scalar_select %p145, %s146, %s147
    %p151 = pneg %p145
    %p152 = scmp.eq.s32.totalorder %s13, 1
    %p153 = por %p151, %p152
    %p154 = scmp.ne.s32.totalorder %s146, %s149
    %p155 = scmp.eq.s32.totalorder %s13, 0
    %p156 = por %p154, %p155
    %p157 = scmp.ne.s32.totalorder %s146, %s149
    %p158 = scmp.eq.s32.totalorder %s18, 1
    %p159 = por %p157, %p158
    %p160 = scmp.ne.s32.totalorder %s149, %s150
    %p161 = scmp.eq.s32.totalorder %s18, 0
    %p162 = por %p160, %p161
    %p163 = scmp.ne.s32.totalorder %s149, %s150
    %p164 = scmp.eq.s32.totalorder %s19, 1
    %p165 = por %p163, %p164
    %p167 = scmp.ne.s32.totalorder %s150, %s166
    %p168 = scmp.eq.s32.totalorder %s19, 0
    %p169 = por %p167, %p168
    %s170 = ssub.s32 %s20, %s39
    %p171 = scmp.eq.s32.totalorder %s170, 0
    %s173 = sadd.s32 %s172, 1
    %s174 = scalar_select %p171, %s172, %s173
    %p177 = pneg %p171
    %p178 = scmp.eq.s32.totalorder %s13, 1
    %p179 = por %p177, %p178
    %p180 = scmp.ne.s32.totalorder %s172, %s175
    %p181 = scmp.eq.s32.totalorder %s13, 0
    %p182 = por %p180, %p181
    %p183 = scmp.ne.s32.totalorder %s172, %s175
    %p184 = scmp.eq.s32.totalorder %s18, 1
    %p185 = por %p183, %p184
    %p186 = scmp.ne.s32.totalorder %s175, %s176
    %p187 = scmp.eq.s32.totalorder %s18, 0
    %p188 = por %p186, %p187
    %p189 = scmp.ne.s32.totalorder %s175, %s176
    %p190 = scmp.eq.s32.totalorder %s19, 1
    %p191 = por %p189, %p190
    %p193 = scmp.ne.s32.totalorder %s176, %s192
    %p194 = scmp.eq.s32.totalorder %s19, 0
    %p195 = por %p193, %p194
    %s196 = ssub.s32 %s20, %s39
    %p197 = scmp.eq.s32.totalorder %s196, 0
    %s199 = sadd.s32 %s198, 1
    %s200 = scalar_select %p197, %s198, %s199
    %p203 = pneg %p197
    %p204 = scmp.eq.s32.totalorder %s13, 1
    %p205 = por %p203, %p204
    %p206 = scmp.ne.s32.totalorder %s198, %s201
    %p207 = scmp.eq.s32.totalorder %s13, 0
    %p208 = por %p206, %p207
    %p209 = scmp.ne.s32.totalorder %s198, %s201
    %p210 = scmp.eq.s32.totalorder %s18, 1
    %p211 = por %p209, %p210
    %p212 = scmp.ne.s32.totalorder %s201, %s202
    %p213 = scmp.eq.s32.totalorder %s18, 0
    %p214 = por %p212, %p213
    %p215 = scmp.ne.s32.totalorder %s201, %s202
    %p216 = scmp.eq.s32.totalorder %s19, 1
    %p217 = por %p215, %p216
    %p219 = scmp.ne.s32.totalorder %s202, %s218
    %p220 = scmp.eq.s32.totalorder %s19, 0
    %p221 = por %p219, %p220
    %s222 = ssub.s32 %s20, %s39
    %p223 = scmp.eq.s32.totalorder %s222, 0
    %s225 = sadd.s32 %s224, 1
    %s226 = scalar_select %p223, %s224, %s225
    %p229 = pneg %p223
    %p230 = scmp.eq.s32.totalorder %s13, 1
    %p231 = por %p229, %p230
    %p232 = scmp.ne.s32.totalorder %s224, %s227
    %p233 = scmp.eq.s32.totalorder %s13, 0
    %p234 = por %p232, %p233
    %p235 = scmp.ne.s32.totalorder %s224, %s227
    %p236 = scmp.eq.s32.totalorder %s18, 1
    %p237 = por %p235, %p236
    %p238 = scmp.ne.s32.totalorder %s227, %s228
    %p239 = scmp.eq.s32.totalorder %s18, 0
    %p240 = por %p238, %p239
    %p241 = scmp.ne.s32.totalorder %s227, %s228
    %p242 = scmp.eq.s32.totalorder %s19, 1
    %p243 = por %p241, %p242
    %p245 = scmp.ne.s32.totalorder %s228, %s244
    %p246 = scmp.eq.s32.totalorder %s19, 0
    %p247 = por %p245, %p246
    %p248 = scmp.le.s32.totalorder 1, %s13
    %p249 = scmp.lt.s32.totalorder %s13, 3
    %p250 = pnand %p248, %p249
    %p251 = pneg %p250
    // Predicated region
    $region9: #{encoder_forward.7} parent=5 // pred_check
      _
    $region10: #{encoder_forward.7} parent=5 // pred_check_branch
      %253 = sbr.rel (%p250) target = $region12
    $region11: #{encoder_forward.7} parent=5 // pred_region
      %s254 = ssub.s32 %s13, 1
      // Predicated region
      $region13: #{encoder_forward.7} parent=11 // pred_check
        %p255 = pneg %p58
      $region14: #{encoder_forward.7} parent=11 // pred_check_branch
        %257 = sbr.rel (%p255) target = $region16
      $region15: #{encoder_forward.7} parent=11 // pred_region
        %s258 = smul.u32 2, %s23
        %p259 = scmp.lt.s32.totalorder %s258, 1
        %s260 = scalar_select %p259, %s258, 1
        %s261 = smul.addr %s260, 2
        %s262 = smul.addr %s261, 4
        %s263 = scalar_lea.vmem %s0, %s262
        %s264 = smul.u32 2, %s23
      $region16: #{encoder_forward.7} parent=11 // pred_fallthru
        _
      // Predicated region
      $region17: #{encoder_forward.7} parent=11 // pred_check
        %p265 = pneg %p84
      $region18: #{encoder_forward.7} parent=11 // pred_check_branch
        %267 = sbr.rel (%p265) target = $region20
      $region19: #{encoder_forward.7} parent=11 // pred_region
        %s268 = smul.u32 2, %s23
        %p269 = scmp.lt.s32.totalorder %s268, 1
        %s270 = scalar_select %p269, %s268, 1
        %s271 = smul.addr %s270, 8
        %s272 = scalar_lea.vmem %s1, %s271
        %s273 = smul.u32 2, %s23
      $region20: #{encoder_forward.7} parent=11 // pred_fallthru
        _
      // Predicated region
      $region21: #{encoder_forward.7} parent=11 // pred_check
        %p274 = pneg %p110
      $region22: #{encoder_forward.7} parent=11 // pred_check_branch
        %276 = sbr.rel (%p274) target = $region24
      $region23: #{encoder_forward.7} parent=11 // pred_region
        %s277 = smul.u32 2, %s23
        %p278 = scmp.lt.s32.totalorder %s277, 1
        %s279 = scalar_select %p278, %s277, 1
        %s280 = smul.addr %s279, 8
        %s281 = scalar_lea.vmem %s2, %s280
        %s282 = smul.u32 2, %s23
      $region24: #{encoder_forward.7} parent=11 // pred_fallthru
        _
      // Predicated region
      $region25: #{encoder_forward.7} parent=11 // pred_check
        %p283 = pneg %p136
      $region26: #{encoder_forward.7} parent=11 // pred_check_branch
        %285 = sbr.rel (%p283) target = $region28
      $region27: #{encoder_forward.7} parent=11 // pred_region
        %s286 = smul.u32 16, %s25
        %p287 = scmp.lt.s32.totalorder %s286, 15
        %s288 = scalar_select %p287, %s286, 15
        %s289 = smul.addr %s288, 2
        %s290 = smul.addr %s289, 4
        %s291 = scalar_lea.vmem %s3, %s290
        %s292 = smul.u32 16, %s25
      $region28: #{encoder_forward.7} parent=11 // pred_fallthru
        _
      // Predicated region
      $region29: #{encoder_forward.7} parent=11 // pred_check
        %p293 = pneg %p162
      $region30: #{encoder_forward.7} parent=11 // pred_check_branch
        %295 = sbr.rel (%p293) target = $region32
      $region31: #{encoder_forward.7} parent=11 // pred_region
        %p296 = scmp.lt.s32.totalorder %s25, 0
        %s297 = scalar_select %p296, %s25, 0
        %s298 = scalar_lea.vmem %s4, %s297
      $region32: #{encoder_forward.7} parent=11 // pred_fallthru
        _
      // Predicated region
      $region33: #{encoder_forward.7} parent=11 // pred_check
        %p299 = pneg %p188
      $region34: #{encoder_forward.7} parent=11 // pred_check_branch
        %301 = sbr.rel (%p299) target = $region36
      $region35: #{encoder_forward.7} parent=11 // pred_region
        %s302 = smul.u32 2, %s23
        %p303 = scmp.lt.s32.totalorder %s302, 1
        %s304 = scalar_select %p303, %s302, 1
        %s305 = smul.addr %s304, 8
        %s306 = scalar_lea.vmem %s5, %s305
        %s307 = smul.u32 2, %s23
      $region36: #{encoder_forward.7} parent=11 // pred_fallthru
        _
      // Predicated region
      $region37: #{encoder_forward.7} parent=11 // pred_check
        %p308 = pneg %p214
      $region38: #{encoder_forward.7} parent=11 // pred_check_branch
        %310 = sbr.rel (%p308) target = $region40
      $region39: #{encoder_forward.7} parent=11 // pred_region
        %s311 = smul.u32 2, %s23
        %p312 = scmp.lt.s32.totalorder %s311, 1
        %s313 = scalar_select %p312, %s311, 1
        %s314 = smul.addr %s313, 8
        %s315 = scalar_lea.vmem %s6, %s314
        %s316 = smul.u32 2, %s23
      $region40: #{encoder_forward.7} parent=11 // pred_fallthru
        _
    $region12: #{encoder_forward.7} parent=5 // pred_fallthru
      _
    %p317 = scmp.lt.s32.totalorder %s13, 2
    // Predicated region
    $region41: #{encoder_forward.7} parent=5 // pred_check
      %p318 = pneg %p317
    $region42: #{encoder_forward.7} parent=5 // pred_check_branch
      %320 = sbr.rel (%p318) target = $region44
    $region43: #{encoder_forward.7} parent=5 // pred_region
      _
    $region44: #{encoder_forward.7} parent=5 // pred_fallthru
      _
    %p321 = scmp.le.s32.totalorder 1, %s13
    %p322 = scmp.lt.s32.totalorder %s13, 3
    %p323 = pnand %p321, %p322
    %p324 = pneg %p323
    // Predicated region
    $region45: #{encoder_forward.7} parent=5 // pred_check
      _
    $region46: #{encoder_forward.7} parent=5 // pred_check_branch
      %326 = sbr.rel (%p323) target = $region48
    $region47: #{encoder_forward.7} parent=5 // pred_region
      %s327 = ssub.s32 %s13, 1
      %s328 = smul.u32 2, %s23
      %p329 = scmp.lt.s32.totalorder %s328, 1
      %s330 = scalar_select %p329, %s328, 1
      %s331 = smul.addr %s330, 2
      %s332 = smul.addr %s331, 4
      %s333 = scalar_lea.vmem %s0, %s332
      %p334 = pneg %p58
      %p335 = pneg %p55
      %s336 = smul.u32 2, %s23
      %p337 = scmp.lt.s32.totalorder %s336, 1
      %s338 = scalar_select %p337, %s336, 1
      %s339 = smul.addr %s338, 8
      %s340 = scalar_lea.vmem %s1, %s339
      %p341 = pneg %p84
      %p342 = pneg %p81
      %s343 = smul.u32 2, %s23
      %p344 = scmp.lt.s32.totalorder %s343, 1
      %s345 = scalar_select %p344, %s343, 1
      %s346 = smul.addr %s345, 8
      %s347 = scalar_lea.vmem %s2, %s346
      %p348 = pneg %p110
      %p349 = pneg %p107
      %s350 = smul.u32 16, %s25
      %p351 = scmp.lt.s32.totalorder %s350, 15
      %s352 = scalar_select %p351, %s350, 15
      %s353 = smul.addr %s352, 2
      %s354 = smul.addr %s353, 4
      %s355 = scalar_lea.vmem %s3, %s354
      %p356 = pneg %p136
      %p357 = pneg %p133
      %p358 = scmp.lt.s32.totalorder %s25, 0
      %s359 = scalar_select %p358, %s25, 0
      %s360 = scalar_lea.vmem %s4, %s359
      %p361 = pneg %p162
      %p362 = pneg %p159
      %s363 = smul.u32 2, %s23
      %p364 = scmp.lt.s32.totalorder %s363, 1
      %s365 = scalar_select %p364, %s363, 1
      %s366 = smul.addr %s365, 8
      %s367 = scalar_lea.vmem %s5, %s366
      %p368 = pneg %p188
      %p369 = pneg %p185
      %s370 = smul.u32 2, %s23
      %p371 = scmp.lt.s32.totalorder %s370, 1
      %s372 = scalar_select %p371, %s370, 1
      %s373 = smul.addr %s372, 8
      %s374 = scalar_lea.vmem %s6, %s373
      %p375 = pneg %p214
      %p376 = pneg %p211
      %p377 = pneg %p240
      %p378 = pneg %p237
      %s379 = smul.u32 2, %s23
      %p380 = scmp.lt.s32.totalorder %s379, 1
      %s381 = scalar_select %p380, %s379, 1
      %s382 = smul.addr %s381, 8
      %s383 = scalar_lea.vmem %s7, %s382
      %s384 = smul.u32 2, %s23
      %p385 = scmp.lt.s32.totalorder %s384, 1
      %s386 = scalar_select %p385, %s384, 1
      %s387 = smul.addr %s386, 2
      %s388 = smul.addr %s387, 4
      %s389 = scalar_lea.vmem %s0, %s388
      %s390 = smul.u32 2, %s23
      %s391 = smul.u32 2, %s23
      %p392 = scmp.lt.s32.totalorder %s391, 1
      %s393 = scalar_select %p392, %s391, 1
      %s394 = smul.addr %s393, 8
      %s395 = scalar_lea.vmem %s1, %s394
      %s396 = smul.u32 2, %s23
      %s397 = smul.u32 2, %s23
      %p398 = scmp.lt.s32.totalorder %s397, 1
      %s399 = scalar_select %p398, %s397, 1
      %s400 = smul.addr %s399, 8
      %s401 = scalar_lea.vmem %s2, %s400
      %s402 = smul.u32 2, %s23
      %s403 = smul.u32 16, %s25
      %p404 = scmp.lt.s32.totalorder %s403, 15
      %s405 = scalar_select %p404, %s403, 15
      %s406 = smul.addr %s405, 2
      %s407 = smul.addr %s406, 4
      %s408 = scalar_lea.vmem %s3, %s407
      %s409 = smul.u32 16, %s25
      %p410 = scmp.lt.s32.totalorder %s25, 0
      %s411 = scalar_select %p410, %s25, 0
      %s412 = scalar_lea.vmem %s4, %s411
      %s413 = smul.u32 2, %s23
      %p414 = scmp.lt.s32.totalorder %s413, 1
      %s415 = scalar_select %p414, %s413, 1
      %s416 = smul.addr %s415, 8
      %s417 = scalar_lea.vmem %s5, %s416
      %s418 = smul.u32 2, %s23
      %s419 = smul.u32 2, %s23
      %p420 = scmp.lt.s32.totalorder %s419, 1
      %s421 = scalar_select %p420, %s419, 1
      %s422 = smul.addr %s421, 8
      %s423 = scalar_lea.vmem %s6, %s422
      %s424 = smul.u32 2, %s23
      %s425 = smul.u32 2, %s23
      %p426 = scmp.lt.s32.totalorder %s425, 1
      %s427 = scalar_select %p426, %s425, 1
      %s428 = smul.addr %s427, 8
      %s429 = scalar_lea.vmem %s7, %s428
      %s430 = smul.u32 2, %s23
      %v432 = vld [vmem:[%s389] sm:$0xff]
      %v433 = vld [vmem:[%s389 + $0x8] sm:$0xff]
      %v434 = vld [vmem:[%s408] sm:$0xff]
      %v435 = vld [vmem:[%s408 + $0x8] sm:$0xff]
      %v436 = vld [vmem:[%s408 + $0x10] sm:$0xff]
      %v437 = vld [vmem:[%s408 + $0x18] sm:$0xff]
      %v438 = vld [vmem:[%s408 + $0x20] sm:$0xff]
      %v439 = vld [vmem:[%s408 + $0x28] sm:$0xff]
      %v440 = vld [vmem:[%s408 + $0x30] sm:$0xff]
      %v441 = vld [vmem:[%s408 + $0x38] sm:$0xff]
      %v442 = vld [vmem:[%s408 + $0x40] sm:$0xff]
      %v443 = vld [vmem:[%s408 + $0x48] sm:$0xff]
      %v444 = vld [vmem:[%s408 + $0x50] sm:$0xff]
      %v445 = vld [vmem:[%s408 + $0x58] sm:$0xff]
      %v446 = vld [vmem:[%s408 + $0x60] sm:$0xff]
      %v447 = vld [vmem:[%s408 + $0x68] sm:$0xff]
      %v448 = vld [vmem:[%s408 + $0x70] sm:$0xff]
      %v449 = vld [vmem:[%s408 + $0x78] sm:$0xff]
      %v452 = vunpack.c.l.b16 %v432
      %v453 = vunpack.c.h.b16 %v432
      %v454 = vunpack.c.l.b16 %v433
      %v455 = vunpack.c.h.b16 %v433
      %v456 = vpack.c.b16 %v454, %v452
      %v457 = vpack.c.b16 %v455, %v453
      %v476 = vunpack.c.l.b16 %v434
      %v477 = vunpack.c.h.b16 %v434
      %v478 = vunpack.c.l.b16 %v435
      %v479 = vunpack.c.h.b16 %v435
      %v480 = vunpack.c.l.b16 %v436
      %v481 = vunpack.c.h.b16 %v436
      %v482 = vunpack.c.l.b16 %v437
      %v483 = vunpack.c.h.b16 %v437
      %v484 = vunpack.c.l.b16 %v438
      %v485 = vunpack.c.h.b16 %v438
      %v486 = vunpack.c.l.b16 %v439
      %v487 = vunpack.c.h.b16 %v439
      %v488 = vunpack.c.l.b16 %v440
      %v489 = vunpack.c.h.b16 %v440
      %v490 = vunpack.c.l.b16 %v441
      %v491 = vunpack.c.h.b16 %v441
      %v492 = vunpack.c.l.b16 %v442
      %v493 = vunpack.c.h.b16 %v442
      %v494 = vunpack.c.l.b16 %v443
      %v495 = vunpack.c.h.b16 %v443
      %v496 = vunpack.c.l.b16 %v444
      %v497 = vunpack.c.h.b16 %v444
      %v498 = vunpack.c.l.b16 %v445
      %v499 = vunpack.c.h.b16 %v445
      %v500 = vunpack.c.l.b16 %v446
      %v501 = vunpack.c.h.b16 %v446
      %v502 = vunpack.c.l.b16 %v447
      %v503 = vunpack.c.h.b16 %v447
      %v504 = vunpack.c.l.b16 %v448
      %v505 = vunpack.c.h.b16 %v448
      %v506 = vunpack.c.l.b16 %v449
      %v507 = vunpack.c.h.b16 %v449
      %v508 = vpack.c.b16 %v478, %v476
      %v509 = vpack.c.b16 %v479, %v477
      %v510 = vpack.c.b16 %v482, %v480
      %v511 = vpack.c.b16 %v483, %v481
      %v512 = vpack.c.b16 %v486, %v484
      %v513 = vpack.c.b16 %v487, %v485
      %v514 = vpack.c.b16 %v490, %v488
      %v515 = vpack.c.b16 %v491, %v489
      %v516 = vpack.c.b16 %v494, %v492
      %v517 = vpack.c.b16 %v495, %v493
      %v518 = vpack.c.b16 %v498, %v496
      %v519 = vpack.c.b16 %v499, %v497
      %v520 = vpack.c.b16 %v502, %v500
      %v521 = vpack.c.b16 %v503, %v501
      %v522 = vpack.c.b16 %v506, %v504
      %v523 = vpack.c.b16 %v507, %v505
      %540 = vmatprep.subr.bf16.mxu0 %v509
      %541 = vmatpush1.bf16.xpose.msra.mxu0 %v508
      %542 = vmatprep.subr.bf16.mxu0 %v511
      %543 = vmatpush1.bf16.xpose.msra.mxu0 %v510
      %544 = vmatprep.subr.bf16.mxu0 %v513
      %545 = vmatpush1.bf16.xpose.msra.mxu0 %v512
      %546 = vmatprep.subr.bf16.mxu0 %v515
      %547 = vmatpush1.bf16.xpose.msra.mxu0 %v514
      %548 = vmatprep.subr.bf16.mxu0 %v517
      %549 = vmatpush1.bf16.xpose.msra.mxu0 %v516
      %550 = vmatprep.subr.bf16.mxu0 %v519
      %551 = vmatpush1.bf16.xpose.msra.mxu0 %v518
      %552 = vmatprep.subr.bf16.mxu0 %v521
      %553 = vmatpush1.bf16.xpose.msra.mxu0 %v520
      %554 = vmatprep.subr.bf16.mxu0 %v523
      %555 = vmatpush1.bf16.xpose.msra.mxu0 %v522
      %556 = vmatprep.subr.bf16.mxu0 0
      %557 = vmatpush1.bf16.xpose.msra.mxu0 0
      %558 = vmatprep.subr.bf16.mxu0 0
      %559 = vmatpush1.bf16.xpose.msra.mxu0 0
      %560 = vmatprep.subr.bf16.mxu0 0
      %561 = vmatpush1.bf16.xpose.msra.mxu0 0
      %562 = vmatprep.subr.bf16.mxu0 0
      %563 = vmatpush1.bf16.xpose.msra.mxu0 0
      %564 = vmatprep.subr.bf16.mxu0 0
      %565 = vmatpush1.bf16.xpose.msra.mxu0 0
      %566 = vmatprep.subr.bf16.mxu0 0
      %567 = vmatpush1.bf16.xpose.msra.mxu0 0
      %568 = vmatprep.subr.bf16.mxu0 0
      %569 = vmatpush1.bf16.xpose.msra.mxu0 0
      %570 = vmatprep.subr.bf16.mxu0 0
      %571 = vmatpush1.bf16.xpose.msra.mxu0 0
      %572 = vmatprep.mubr.bf16.mxu0 %v457
      %573 = vmatmul.mubr.bf16.gmra.mrb[0].mxu0 %v456
      %v574 = vpop.f32.mrb[0].mxu0
      %v575 = vadd.f32 0.0, %v574
      %v576 = vpop.f32.mrb[0].mxu0
      %v577 = vpop.f32.mrb[0].mxu0
      %v578 = vadd.f32 0.0, %v577
      %v579 = vpop.f32.mrb[0].mxu0
      %580 = vdwg.mxu0
      %v581 = vld [vmem:[%s395] sm:$0xff]
      %v582 = vld [vmem:[%s395 + $0x8] sm:$0xff]
      %v583 = vld [vmem:[%s412] sm:$0x1]
      %585 = vset.pattern.permute.xlu0 0
      %586 = vperm.xlu0 %585, %v581
      %v587 = vpop.permute.xlu0 %586
      %590 = vset.pattern.permute.xlu0 0
      %591 = vperm.xlu0 %590, %v582
      %v592 = vpop.permute.xlu0 %591
      %v595 = vlaneseq
      %v596 = vshrl.u32 %v595, 7
      %v597 = vsub.s32 0, %v596
      %v598 = vrot.slane %v583, %v597
      %v600 = vadd.f32 %v587, %v598
      %v601 = vadd.f32 %v592, %v598
      %v602 = vmul.f32 %v575, 2.0
      %v603 = vmul.f32 %v578, 2.0
      %v604 = vsub.f32 %v600, %v602
      %v605 = vsub.f32 %v601, %v603
      %s606 = smul.u32 %s25, 128
      %v607 = vlaneseq
      %v608 = vand.u32 %v607, 127
      %v609 = vstv %s606
      %v610 = vadd.s32 %v609, %v608
      %v611 = vld [vmem:[%s417] sm:$0xff]
      %v612 = vld [vmem:[%s417 + $0x8] sm:$0xff]
      %613 = vset.pattern.permute.xlu0 0
      %614 = vperm.xlu0 %613, %v611
      %v615 = vpop.permute.xlu0 %614
      %616 = vset.pattern.permute.xlu0 0
      %617 = vperm.xlu0 %616, %v612
      %v618 = vpop.permute.xlu0 %617
      %vm619 = vcmp.eq.s32.totalorder %v610, %v615
      %vm620 = vcmp.eq.s32.totalorder %v610, %v618
      %v621 = vsel %vm619, 1, 0
      %v622 = vsel %vm620, 1, 0
      %v623 = vcvt.s32.f32 %v621
      %v624 = vcvt.s32.f32 %v622
      %v625 = vsub.f32 1.0, %v623
      %v626 = vsub.f32 1.0, %v624
      %v627 = vld [vmem:[%s423] sm:$0xff]
      %v628 = vld [vmem:[%s423 + $0x8] sm:$0xff]
      %629 = vset.pattern.permute.xlu0 0
      %630 = vperm.xlu0 %629, %v627
      %v631 = vpop.permute.xlu0 %630
      %632 = vset.pattern.permute.xlu0 0
      %633 = vperm.xlu0 %632, %v628
      %v634 = vpop.permute.xlu0 %633
      %vm635 = vcmp.eq.s32.totalorder %v610, %v631
      %vm636 = vcmp.eq.s32.totalorder %v610, %v634
      %v637 = vsel %vm635, 1, 0
      %v638 = vsel %vm636, 1, 0
      %v639 = vcvt.s32.f32 %v637
      %v640 = vcvt.s32.f32 %v638
      %v641 = vsub.f32 %v625, %v639
      %v642 = vsub.f32 %v626, %v640
      %vm643 = vcmp.lt.s32.totalorder %v610, 64
      %v644 = vld [vmem:[%s401] sm:$0xff]
      %v645 = vld [vmem:[%s401 + $0x8] sm:$0xff]
      %647 = vset.pattern.permute.xlu0 0
      %648 = vperm.xlu0 %647, %v644
      %v649 = vpop.permute.xlu0 %648
      %652 = vset.pattern.permute.xlu0 0
      %653 = vperm.xlu0 %652, %v645
      %v654 = vpop.permute.xlu0 %653
      %v656 = vsub.f32 %v649, %v604
      %v657 = vsub.f32 %v654, %v605
      %v658 = vadd.f32 %v656, 3.0
      %v659 = vadd.f32 %v657, 3.0
      %v660 = vmul.f32 %v658, %v641
      %v661 = vmul.f32 %v659, %v642
      %v662 = vsel %vm643, %v660, 0.0
      %v663 = vsel %vm643, %v661, 0.0
      %p664 = scmp.eq.s32.totalorder %s24, 0
      %p665 = scmp.eq.s32.totalorder %s25, 0
      %p666 = pnand %p664, %p665
      %p667 = pneg %p666
      // Predicated region
      $region49: #{encoder_forward.7} parent=47 // pred_check
        _
      $region50: #{encoder_forward.7} parent=47 // pred_check_branch
        %669 = sbr.rel (%p666) target = $region52
      $region51: #{encoder_forward.7} parent=47 // pred_region
        %vm670 = vcmask 7168
        %671 = vst.msk [vmem:[#allocation2] sm:$0xff] %vm670, 0.0
        %672 = vst.msk [vmem:[#allocation2 + $0x8] sm:$0xff] %vm670, 0.0
        %673 = vst.msk [vmem:[#allocation3] sm:$0xff] %vm670, 0.0
        %674 = vst.msk [vmem:[#allocation3 + $0x8] sm:$0xff] %vm670, 0.0
        %675 = vst.msk [vmem:[#allocation4] sm:$0xff] %vm670, -inf
        %676 = vst.msk [vmem:[#allocation4 + $0x8] sm:$0xff] %vm670, -inf
      $region52: #{encoder_forward.7} parent=47 // pred_fallthru
        _
      // Predicated region
      $region53: #{encoder_forward.7} parent=47 // pred_check
        %p677 = pneg %p664
      $region54: #{encoder_forward.7} parent=47 // pred_check_branch
        %679 = sbr.rel (%p677) target = $region56
      $region55: #{encoder_forward.7} parent=47 // pred_region
        %v680 = vld [vmem:[#allocation2] sm:$0xff]
        %v681 = vld [vmem:[#allocation2 + $0x8] sm:$0xff]
        %682 = vadd.xlane.f32.xlu0 %v662
        %v683 = vpop.xlane.xlu0 %682
        %684 = vadd.xlane.f32.xlu0 %v663
        %v685 = vpop.xlane.xlu0 %684
        %v686 = vadd.f32 %v680, %v683
        %v687 = vadd.f32 %v681, %v685
        %vm688 = vcmask 7168
        %689 = vst.msk [vmem:[#allocation2] sm:$0xff] %vm688, %v686
        %690 = vst.msk [vmem:[#allocation2 + $0x8] sm:$0xff] %vm688, %v687
        %v691 = vld [vmem:[#allocation3] sm:$0xff]
        %v692 = vld [vmem:[#allocation3 + $0x8] sm:$0xff]
        %v693 = vmul.f32 %v662, %v662
        %v694 = vmul.f32 %v663, %v663
        %695 = vadd.xlane.f32.xlu0 %v693
        %v696 = vpop.xlane.xlu0 %695
        %697 = vadd.xlane.f32.xlu0 %v694
        %v698 = vpop.xlane.xlu0 %697
        %v699 = vadd.f32 %v691, %v696
        %v700 = vadd.f32 %v692, %v698
        %701 = vst.msk [vmem:[#allocation3] sm:$0xff] %vm688, %v699
        %702 = vst.msk [vmem:[#allocation3 + $0x8] sm:$0xff] %vm688, %v700
        %v703 = vsel %vm643, %v660, -inf
        %v704 = vsel %vm643, %v661, -inf
        %705 = vmax.xlane.f32.xlu0 %v703
        %v706 = vpop.xlane.xlu0 %705
        %707 = vmax.xlane.f32.xlu0 %v704
        %v708 = vpop.xlane.xlu0 %707
        %v709 = vld [vmem:[#allocation4] sm:$0xff]
        %v710 = vld [vmem:[#allocation4 + $0x8] sm:$0xff]
        %v711 = vmax.f32 %v709, %v706
        %v712 = vmax.f32 %v710, %v708
        %713 = vst.msk [vmem:[#allocation4] sm:$0xff] %vm688, %v711
        %714 = vst.msk [vmem:[#allocation4 + $0x8] sm:$0xff] %vm688, %v712
      $region56: #{encoder_forward.7} parent=47 // pred_fallthru
        _
      %p715 = scmp.eq.s32.totalorder %s24, 1
      // Predicated region
      $region57: #{encoder_forward.7} parent=47 // pred_check
        %p716 = pneg %p715
      $region58: #{encoder_forward.7} parent=47 // pred_check_branch
        %718 = sbr.rel (%p716) target = $region60
      $region59: #{encoder_forward.7} parent=47 // pred_region
        // Predicated region
        $region61: #{encoder_forward.7} parent=59 // pred_check
          %p719 = pneg %p665
        $region62: #{encoder_forward.7} parent=59 // pred_check_branch
          %721 = sbr.rel (%p719) target = $region64
        $region63: #{encoder_forward.7} parent=59 // pred_region
          %vm722 = vcmask 7168
          %723 = vst.msk [vmem:[#allocation5] sm:$0xff] %vm722, 0.0
          %724 = vst.msk [vmem:[#allocation5 + $0x8] sm:$0xff] %vm722, 0.0
        $region64: #{encoder_forward.7} parent=59 // pred_fallthru
          _
        %v725 = vld [vmem:[#allocation2] sm:$0xff]
        %v726 = vld [vmem:[#allocation2 + $0x8] sm:$0xff]
        %v727 = vmul.f32 %v725, 0.015625
        %v728 = vmul.f32 %v726, 0.015625
        %v729 = vld [vmem:[#allocation3] sm:$0xff]
        %v730 = vld [vmem:[#allocation3 + $0x8] sm:$0xff]
        %v731 = vmul.f32 %v729, 0.015625
        %v732 = vmul.f32 %v730, 0.015625
        %v733 = vmul.f32 %v727, %v727
        %v734 = vmul.f32 %v728, %v728
        %v735 = vsub.f32 %v731, %v733
        %v736 = vsub.f32 %v732, %v734
        %v737 = vmax.f32 %v735, 1e-12
        %v738 = vmax.f32 %v736, 1e-12
        %v739 = vrsqrt.pop %v737
        %v740 = vrsqrt.pop %v738
        %v741 = vld [vmem:[#allocation4] sm:$0xff]
        %v742 = vld [vmem:[#allocation4 + $0x8] sm:$0xff]
        %v743 = vsub.f32 %v741, %v727
        %v744 = vsub.f32 %v742, %v728
        %v745 = vmul.f32 %v743, 20.0
        %v746 = vmul.f32 %v744, 20.0
        %v747 = vmul.f32 %v745, %v739
        %v748 = vmul.f32 %v746, %v740
        %v749 = vadd.f32 %v747, 8.0
        %v750 = vadd.f32 %v748, 8.0
        %752 = vset.pattern.permute.xlu0 0
        %753 = vperm.xlu0 %752, %v727
        %v754 = vpop.permute.xlu0 %753
        %757 = vset.pattern.permute.xlu0 0
        %758 = vperm.xlu0 %757, %v728
        %v759 = vpop.permute.xlu0 %758
        %v761 = vsub.f32 %v662, %v754
        %v762 = vsub.f32 %v663, %v759
        %v763 = vmul.f32 %v761, 20.0
        %v764 = vmul.f32 %v762, 20.0
        %766 = vset.pattern.permute.xlu0 0
        %767 = vperm.xlu0 %766, %v739
        %v768 = vpop.permute.xlu0 %767
        %771 = vset.pattern.permute.xlu0 0
        %772 = vperm.xlu0 %771, %v740
        %v773 = vpop.permute.xlu0 %772
        %v775 = vmul.f32 %v763, %v768
        %v776 = vmul.f32 %v764, %v773
        %v777 = vadd.f32 %v775, 8.0
        %v778 = vadd.f32 %v776, 8.0
        %v779 = vld [vmem:[#allocation5] sm:$0xff]
        %v780 = vld [vmem:[#allocation5 + $0x8] sm:$0xff]
        %782 = vset.pattern.permute.xlu0 0
        %783 = vperm.xlu0 %782, %v749
        %v784 = vpop.permute.xlu0 %783
        %787 = vset.pattern.permute.xlu0 0
        %788 = vperm.xlu0 %787, %v750
        %v789 = vpop.permute.xlu0 %788
        %v791 = vsub.f32 %v777, %v784
        %v792 = vsub.f32 %v778, %v789
        %v793 = vmul.f32 %v791, 1.442695
        %v794 = vpow.pop %v793
        %v795 = vmul.f32 %v792, 1.442695
        %v796 = vpow.pop %v795
        %v797 = vsel %vm643, %v794, 0.0
        %v798 = vsel %vm643, %v796, 0.0
        %799 = vadd.xlane.f32.xlu0 %v797
        %v800 = vpop.xlane.xlu0 %799
        %801 = vadd.xlane.f32.xlu0 %v798
        %v802 = vpop.xlane.xlu0 %801
        %v803 = vadd.f32 %v779, %v800
        %v804 = vadd.f32 %v780, %v802
        %vm805 = vcmask 7168
        %806 = vst.msk [vmem:[#allocation5] sm:$0xff] %vm805, %v803
        %807 = vst.msk [vmem:[#allocation5 + $0x8] sm:$0xff] %vm805, %v804
        // Predicated region
        $region65: #{encoder_forward.7} parent=59 // pred_check
          %p808 = pneg %p665
        $region66: #{encoder_forward.7} parent=59 // pred_check_branch
          %810 = sbr.rel (%p808) target = $region68
        $region67: #{encoder_forward.7} parent=59 // pred_region
          %v811 = vld [vmem:[#allocation5] sm:$0xff]
          %v812 = vld [vmem:[#allocation5 + $0x8] sm:$0xff]
          %v813 = vlog2.pop %v811
          %v814 = vmul.f32 %v813, 0.6931472
          %v815 = vlog2.pop %v812
          %v816 = vmul.f32 %v815, 0.6931472
          %v817 = vadd.f32 %v749, %v814
          %v818 = vadd.f32 %v750, %v816
          %819 = vst.msk [vmem:[%s429] sm:$0xff] %vm805, %v817
          %820 = vst.msk [vmem:[%s429 + $0x8] sm:$0xff] %vm805, %v818
        $region68: #{encoder_forward.7} parent=59 // pred_fallthru
          _
      $region60: #{encoder_forward.7} parent=47 // pred_fallthru
        _
      %s821 = smul.u32 2, %s23
      %p822 = scmp.lt.s32.totalorder %s821, 1
      %s823 = scalar_select %p822, %s821, 1
      %s824 = smul.addr %s823, 8
      %s825 = scalar_lea.vmem %s7, %s824
      // Predicated region
      $region69: #{encoder_forward.7} parent=47 // pred_check
        %p826 = pneg %p237
      $region70: #{encoder_forward.7} parent=47 // pred_check_branch
        %828 = sbr.rel (%p826) target = $region72
      $region71: #{encoder_forward.7} parent=47 // pred_region
        %s829 = smul.u32 2, %s23
      $region72: #{encoder_forward.7} parent=47 // pred_fallthru
        _
      // Predicated region
      $region73: #{encoder_forward.7} parent=47 // pred_check
        %p830 = pneg %p237
      $region74: #{encoder_forward.7} parent=47 // pred_check_branch
        %832 = sbr.rel (%p830) target = $region76
      $region75: #{encoder_forward.7} parent=47 // pred_region
        %s833 = smul.u32 2, %s23
        %p834 = scmp.lt.s32.totalorder %s833, 1
        %s835 = scalar_select %p834, %s833, 1
        %s836 = smul.addr %s835, 8
        %s837 = scalar_lea.vmem %s7, %s836
      $region76: #{encoder_forward.7} parent=47 // pred_fallthru
        _
    $region48: #{encoder_forward.7} parent=5 // pred_fallthru
      _
    %p838 = scmp.le.s32.totalorder 2, %s13
    // Predicated region
    $region77: #{encoder_forward.7} parent=5 // pred_check
      %p839 = pneg %p838
    $region78: #{encoder_forward.7} parent=5 // pred_check_branch
      %841 = sbr.rel (%p839) target = $region80
    $region79: #{encoder_forward.7} parent=5 // pred_region
      %s842 = ssub.s32 %s13, 2
    $region80: #{encoder_forward.7} parent=5 // pred_fallthru
      _
  $region6: #{encoder_forward.7} parent=0 // loop_footer
    %s17 = sadd.s32 1, %s13
  $region7: #{encoder_forward.7} parent=0 // loop_footer_branch
    %12 = sbr.rel target = $region3
  $region8: #{encoder_forward.7} parent=0 // loop_exit
    _

</llo_original>
